<compile_context>
chip_gen: v7x
topology: tpu7x:2x2x1
jax: 0.10.0
libtpu: 0.0.40
codegen_flags: <defaults>
</compile_context>

<pallas_src>
import numpy as np
import jax
import jax.numpy as jnp
from jax import lax
from jax.experimental import pallas as pl
from jax.experimental.pallas import tpu as pltpu


def make_gru_kernel(Bt, Tc, H, num_dir, mxu_dtype):
    """Time-chunked GRU recurrence over a (Bt)-row batch tile.

    Refs (in order): seq_len, gi_fwd[, gi_bwd], w_hh_fwd[, w_hh_bwd],
                     b_hn_fwd[, b_hn_bwd], out, h_scratch.
    """

    def kernel(*refs):
        seqlen_ref = refs[0]
        gi_refs = refs[1:1 + num_dir]                       # (Tc, Bt, 3H) each
        whh_refs = refs[1 + num_dir:1 + 2 * num_dir]        # (H, 3H) each
        bhn_refs = refs[1 + 2 * num_dir:1 + 3 * num_dir]    # (1, H) each
        out_ref = refs[1 + 3 * num_dir]                     # (Bt, num_dir*H)
        h_ref = refs[2 + 3 * num_dir]                       # (Bt, num_dir*H) f32

        c = pl.program_id(1)
        n_chunks = pl.num_programs(1)

        @pl.when(c == 0)
        def _():
            h_ref[...] = jnp.zeros_like(h_ref)

        # ---- hoisted loads / broadcasts (once per chunk, not per step) -----
        seq_b = jnp.broadcast_to(seqlen_ref[...], (Bt, H))           # int32
        whh = [whh_refs[d][...] for d in range(num_dir)]             # mxu dtype
        bhn = [jnp.broadcast_to(bhn_refs[d][...], (Bt, H))
               for d in range(num_dir)]                              # f32

        # Global time offset of this chunk per direction: the backward
        # direction's gi BlockSpec streams chunks in reverse time order.
        t_base = [c * Tc, (n_chunks - 1 - c) * Tc]

        def step(i, carry):
            new = []
            for d in range(num_dir):
                h = carry[d]                                         # (Bt,H) f32
                local = i if d == 0 else Tc - 1 - i                  # bwd reversed
                t = t_base[d] + local
                gi = gi_refs[d][local].astype(jnp.float32)           # (Bt, 3H)
                # ONE fused MXU push per direction per step: gh = h @ [Wr|Wz|Wn]
                gh = jnp.dot(h.astype(mxu_dtype), whh[d],
                             preferred_element_type=jnp.float32)     # (Bt, 3H)
                # PyTorch gate order r,z,n; b_ir+b_hr / b_iz+b_hz / b_in folded
                # into gi in the wrapper; b_hn kept inside r*(...) per GRU spec.
                rz = jax.nn.sigmoid(gi[:, :2 * H] + gh[:, :2 * H])   # one EUP slab
                r = rz[:, :H]
                z = rz[:, H:]
                n = jnp.tanh(gi[:, 2 * H:] + r * (gh[:, 2 * H:] + bhn[d]))
                h_new = (1.0 - z) * n + z * h
                # masked update == pack_padded_sequence semantics
                new.append(jnp.where(seq_b > t, h_new, h))
            return tuple(new)

        h0 = tuple(h_ref[:, d * H:(d + 1) * H] for d in range(num_dir))
        h_fin = lax.fori_loop(0, Tc, step, h0, unroll=True)
        for d in range(num_dir):
            h_ref[:, d * H:(d + 1) * H] = h_fin[d]

        @pl.when(c == n_chunks - 1)
        def _():
            out_ref[...] = h_ref[...]        # single lane-dense [h_fwd | h_bwd]

    return kernel


def rnn_encoder_forward(seqs, seq_lens, params, hid_size, bidirectional,
                        *, mxu_dtype=jnp.float32, time_chunk=4):
    """seqs: (B, T, I) f32, seq_lens: (B,) int -> (B, num_dir*H) f32."""
    B, T, I = seqs.shape
    H = hid_size
    num_dir = 2 if bidirectional else 1

    # Batch tile: sublane-aligned; multiple of 16 when gi is stored bf16.
    sub = 8 if mxu_dtype == jnp.float32 else 16
    B_pad = ((B + sub - 1) // sub) * sub
    Bt = sub
    n_btiles = B_pad // Bt

    # Time chunking (only the small inner loop is unrolled).
    Tc = max(1, min(int(time_chunk), T))
    n_chunks = (T + Tc - 1) // Tc
    T_pad = n_chunks * Tc

    x = jnp.asarray(seqs, jnp.float32)
    x = jnp.pad(x, ((0, B_pad - B), (0, T_pad - T), (0, 0)))
    # padded batch rows get seq_len 0 -> never update, stay exactly zero;
    # padded timesteps are masked out by seq_len <= t for both directions.
    sl = jnp.pad(jnp.asarray(seq_lens, jnp.int32), (0, B_pad - B))
    sl = sl.reshape(B_pad, 1)

    gi_list, whh_list, bhn_list = [], [], []
    for d in range(num_dir):
        w_ih = jnp.asarray(params[d][0], jnp.float32)       # (3H, I)
        w_hh = jnp.asarray(params[d][1], jnp.float32)       # (3H, H)
        b_ih = jnp.asarray(params[d][2], jnp.float32)       # (3H,)
        b_hh = jnp.asarray(params[d][3], jnp.float32)       # (3H,)
        # Fold b_ir+b_hr, b_iz+b_hz, b_in into the input projection bias;
        # b_hn stays in the recurrence (scaled by r per PyTorch GRU).
        bias = jnp.concatenate([b_ih[:H] + b_hh[:H],
                                b_ih[H:2 * H] + b_hh[H:2 * H],
                                b_ih[2 * H:]])
        # Input projection hoisted OUT of the recurrence kernel: one fully
        # parallel matmul over all T steps, streamed back in via BlockSpec.
        gi = jnp.dot(x, w_ih.T, precision=lax.Precision.HIGHEST) + bias
        gi = jnp.transpose(gi, (1, 0, 2)).astype(mxu_dtype)  # (T_pad,B_pad,3H)
        gi_list.append(gi)
        whh_list.append(w_hh.T.astype(mxu_dtype))            # (H, 3H) = [r|z|n]
        bhn_list.append(b_hh[2 * H:].reshape(1, H))           # (1, H) f32

    kernel = make_gru_kernel(Bt, Tc, H, num_dir, mxu_dtype)

    in_specs = [pl.BlockSpec((Bt, 1), lambda b, c: (b, 0))]            # seq_len
    in_specs.append(pl.BlockSpec((Tc, Bt, 3 * H),
                                 lambda b, c: (c, b, 0)))               # gi fwd
    if num_dir == 2:
        in_specs.append(pl.BlockSpec((Tc, Bt, 3 * H),
                                     lambda b, c: (n_chunks - 1 - c, b, 0)))  # gi bwd (reversed)
    for _ in range(num_dir):
        in_specs.append(pl.BlockSpec((H, 3 * H), lambda b, c: (0, 0)))  # W_hh
    for _ in range(num_dir):
        in_specs.append(pl.BlockSpec((1, H), lambda b, c: (0, 0)))      # b_hn

    out = pl.pallas_call(
        kernel,
        out_shape=jax.ShapeDtypeStruct((B_pad, num_dir * H), jnp.float32),
        grid=(n_btiles, n_chunks),
        in_specs=in_specs,
        out_specs=pl.BlockSpec((Bt, num_dir * H), lambda b, c: (b, 0)),
        scratch_shapes=[pltpu.VMEM((Bt, num_dir * H), jnp.float32)],   # h carry
        compiler_params=pltpu.CompilerParams(
            dimension_semantics=("parallel", "arbitrary")),
    )(sl, *gi_list, *whh_list, *bhn_list)
    return out[:B]


def init_gru_params(key, input_size, hid_size, bidirectional):
    """Params matching nn.GRU shapes: weights orthogonal, biases uniform."""
    H = hid_size
    num_dir = 2 if bidirectional else 1
    ortho = jax.nn.initializers.orthogonal()
    k = 1.0 / np.sqrt(H)
    params = []
    for _ in range(num_dir):
        key, k1, k2, k3, k4 = jax.random.split(key, 5)
        w_ih = ortho(k1, (3 * H, input_size), jnp.float32)
        w_hh = ortho(k2, (3 * H, H), jnp.float32)
        b_ih = jax.random.uniform(k3, (3 * H,), jnp.float32, -k, k)
        b_hh = jax.random.uniform(k4, (3 * H,), jnp.float32, -k, k)
        params.append((w_ih, w_hh, b_ih, b_hh))
    return params


def gru_reference(seqs, seq_lens, params, H, num_dir):
    """Pure numpy reference of the same forward (sanity check)."""
    seqs = np.asarray(seqs, np.float32)
    seq_lens = np.asarray(seq_lens)
    B, T, I = seqs.shape
    outs = []
    for d in range(num_dir):
        w_ih, w_hh, b_ih, b_hh = [np.asarray(p, np.float32) for p in params[d]]
        h = np.zeros((B, H), np.float32)
        order = range(T) if d == 0 else range(T - 1, -1, -1)
        for t in order:
            x_t = seqs[:, t, :]
            gi = x_t @ w_ih.T + b_ih
            gh = h @ w_hh.T + b_hh
            r = 1.0 / (1.0 + np.exp(-(gi[:, :H] + gh[:, :H])))
            z = 1.0 / (1.0 + np.exp(-(gi[:, H:2 * H] + gh[:, H:2 * H])))
            n = np.tanh(gi[:, 2 * H:] + r * gh[:, 2 * H:])
            h_new = (1.0 - z) * n + z * h
            mask = (seq_lens > t)[:, None]
            h = np.where(mask, h_new, h)
        outs.append(h)
    return np.concatenate(outs, axis=1)


if __name__ == "__main__":
    B, T = 4, 8
    INPUT_SIZE, HID_SIZE = 16, 32
    BIDIRECTIONAL = True
    num_dir = 2 if BIDIRECTIONAL else 1

    key = jax.random.PRNGKey(0)
    key, k_x = jax.random.split(key)
    seqs = jax.random.normal(k_x, (B, T, INPUT_SIZE), jnp.float32)
    seq_lens = jnp.array([8, 5, 3, 6], jnp.int32)

    params = init_gru_params(key, INPUT_SIZE, HID_SIZE, BIDIRECTIONAL)
    ref = gru_reference(seqs, seq_lens, params, HID_SIZE, num_dir)

    # f32 MXU feed (reference-accurate path; recommended default on v5e).
    enc = rnn_encoder_forward(seqs, seq_lens, params, HID_SIZE, BIDIRECTIONAL,
                              mxu_dtype=jnp.float32, time_chunk=4)
    enc = jax.block_until_ready(enc)
    assert enc.shape == (B, num_dir * HID_SIZE)
    np.testing.assert_allclose(np.asarray(enc), ref, rtol=1e-3, atol=1e-3)

    # bf16 MXU feed (preferred operand format on v6e/v7x; gate math stays
    # f32).  Looser tolerance per the reduced-precision operands.
    enc_bf16 = rnn_encoder_forward(seqs, seq_lens, params, HID_SIZE,
                                   BIDIRECTIONAL, mxu_dtype=jnp.bfloat16,
                                   time_chunk=4)
    enc_bf16 = jax.block_until_ready(enc_bf16)
    assert enc_bf16.shape == (B, num_dir * HID_SIZE)
    np.testing.assert_allclose(np.asarray(enc_bf16), ref, rtol=1e-1, atol=1e-1)

    print("KERNEL_OK")
</pallas_src>

<mosaic_0001>
module attributes {stable_mosaic.version = 11 : i64} {
  func.func @kernel(%arg0: i32, %arg1: i32, %arg2: memref<8x1xi32, #tpu.memory_space<vmem>>, %arg3: memref<4x8x96xf32, #tpu.memory_space<vmem>>, %arg4: memref<4x8x96xf32, #tpu.memory_space<vmem>>, %arg5: memref<32x96xf32, #tpu.memory_space<vmem>>, %arg6: memref<32x96xf32, #tpu.memory_space<vmem>>, %arg7: memref<1x32xf32, #tpu.memory_space<vmem>>, %arg8: memref<1x32xf32, #tpu.memory_space<vmem>>, %arg9: memref<8x64xf32, #tpu.memory_space<vmem>>, %arg10: memref<8x64xf32, #tpu.memory_space<vmem>>) attributes {dimension_semantics = [#tpu.dimension_semantics<parallel>, #tpu.dimension_semantics<arbitrary>], iteration_bounds = array<i64: 1, 2>, scalar_prefetch = 0 : i64, scratch_operands = 1 : i64, tpu.core_type = #tpu.core_type<tc>, window_params = [{transform_indices = @transform_0, window_bounds = array<i64: 8, 1>}, {transform_indices = @transform_1, window_bounds = array<i64: 4, 8, 96>}, {transform_indices = @transform_2, window_bounds = array<i64: 4, 8, 96>}, {pipeline_mode = #tpu.pipeline_mode<synchronous>, transform_indices = @transform_3, window_bounds = array<i64: 32, 96>}, {pipeline_mode = #tpu.pipeline_mode<synchronous>, transform_indices = @transform_4, window_bounds = array<i64: 32, 96>}, {pipeline_mode = #tpu.pipeline_mode<synchronous>, transform_indices = @transform_5, window_bounds = array<i64: 1, 32>}, {pipeline_mode = #tpu.pipeline_mode<synchronous>, transform_indices = @transform_6, window_bounds = array<i64: 1, 32>}, {transform_indices = @transform_7, window_bounds = array<i64: 8, 64>}]} {
    %c0_i32 = arith.constant 0 : i32
    %0 = arith.cmpi eq, %arg1, %c0_i32 : i32
    %1 = arith.extui %0 : i1 to i32
    %c0_i32_0 = arith.constant 0 : i32
    %2 = arith.cmpi ne, %1, %c0_i32_0 : i32
    scf.if %2 {
      %cst_66 = arith.constant 0.000000e+00 : f32
      %260 = vector.broadcast %cst_66 : f32 to vector<8x64xf32>
      %c0_67 = arith.constant 0 : index
      %c0_68 = arith.constant 0 : index
      %261 = vector.load %arg10[%c0_67, %c0_68] : memref<8x64xf32, #tpu.memory_space<vmem>>, vector<8x64xf32>
      tpu.vector_store %arg10[%c0_67, %c0_68], %260 {strides = array<i32>} : memref<8x64xf32, #tpu.memory_space<vmem>>, vector<8x64xf32>,
    } else {
    }
    %c0 = arith.constant 0 : index
    %c0_1 = arith.constant 0 : index
    %3 = vector.load %arg2[%c0, %c0_1] : memref<8x1xi32, #tpu.memory_space<vmem>>, vector<8x1xi32>
    %4 = vector.shape_cast %3 : vector<8x1xi32> to vector<8x1xi32>
    %5 = vector.broadcast %4 : vector<8x1xi32> to vector<8x32xi32>
    %c0_2 = arith.constant 0 : index
    %c0_3 = arith.constant 0 : index
    %6 = vector.load %arg5[%c0_2, %c0_3] : memref<32x96xf32, #tpu.memory_space<vmem>>, vector<32x96xf32>
    %c0_4 = arith.constant 0 : index
    %c0_5 = arith.constant 0 : index
    %7 = vector.load %arg6[%c0_4, %c0_5] : memref<32x96xf32, #tpu.memory_space<vmem>>, vector<32x96xf32>
    %c0_6 = arith.constant 0 : index
    %c0_7 = arith.constant 0 : index
    %8 = vector.load %arg7[%c0_6, %c0_7] : memref<1x32xf32, #tpu.memory_space<vmem>>, vector<1x32xf32>
    %9 = vector.shape_cast %8 : vector<1x32xf32> to vector<1x32xf32>
    %10 = vector.broadcast %9 : vector<1x32xf32> to vector<8x32xf32>
    %c0_8 = arith.constant 0 : index
    %c0_9 = arith.constant 0 : index
    %11 = vector.load %arg8[%c0_8, %c0_9] : memref<1x32xf32, #tpu.memory_space<vmem>>, vector<1x32xf32>
    %12 = vector.shape_cast %11 : vector<1x32xf32> to vector<1x32xf32>
    %13 = vector.broadcast %12 : vector<1x32xf32> to vector<8x32xf32>
    %c4_i32 = arith.constant 4 : i32
    %14 = arith.muli %arg1, %c4_i32 : i32
    %c1_i32 = arith.constant 1 : i32
    %15 = arith.subi %c1_i32, %arg1 : i32
    %c4_i32_10 = arith.constant 4 : i32
    %16 = arith.muli %15, %c4_i32_10 : i32
    %c0_11 = arith.constant 0 : index
    %c0_12 = arith.constant 0 : index
    %17 = vector.load %arg10[%c0_11, %c0_12] : memref<8x64xf32, #tpu.memory_space<vmem>>, vector<8x32xf32>
    %c0_13 = arith.constant 0 : index
    %c32 = arith.constant 32 : index
    %18 = vector.load %arg10[%c0_13, %c32] : memref<8x64xf32, #tpu.memory_space<vmem>>, vector<8x32xf32>
    %c0_i32_14 = arith.constant 0 : i32
    %19 = arith.addi %14, %c0_i32_14 : i32
    %20 = arith.index_cast %c0_i32_14 : i32 to index
    %c0_15 = arith.constant 0 : index
    %c0_16 = arith.constant 0 : index
    %21 = vector.load %arg3[%20, %c0_15, %c0_16] : memref<4x8x96xf32, #tpu.memory_space<vmem>>, vector<1x8x96xf32>
    %22 = vector.shape_cast %21 : vector<1x8x96xf32> to vector<8x96xf32>
    %cst = arith.constant dense<0.000000e+00> : vector<8x96xf32>
    %23 = tpu.matmul %17, %6, %cst {dimension_numbers = #tpu.dot_dimension_numbers<[1], [0], [0], [1], [0, 0, 1, 1], [], []>} : vector<8x32xf32>, vector<32x96xf32>, vector<8x96xf32> -> vector<8x96xf32>
    %24 = vector.extract_strided_slice %22 {offsets = [0, 0], sizes = [8, 64], strides = [1, 1]} : vector<8x96xf32> to vector<8x64xf32>
    %25 = vector.extract_strided_slice %23 {offsets = [0, 0], sizes = [8, 64], strides = [1, 1]} : vector<8x96xf32> to vector<8x64xf32>
    %26 = arith.addf %24, %25 : vector<8x64xf32>
    %27 = arith.negf %26 : vector<8x64xf32>
    %28 = math.exp %27 : vector<8x64xf32>
    %cst_17 = arith.constant 1.000000e+00 : f32
    %29 = vector.broadcast %cst_17 : f32 to vector<8x64xf32>
    %30 = arith.addf %29, %28 : vector<8x64xf32>
    %31 = arith.divf %29, %30 : vector<8x64xf32>
    %32 = vector.extract_strided_slice %31 {offsets = [0, 0], sizes = [8, 32], strides = [1, 1]} : vector<8x64xf32> to vector<8x32xf32>
    %33 = vector.extract_strided_slice %31 {offsets = [0, 32], sizes = [8, 32], strides = [1, 1]} : vector<8x64xf32> to vector<8x32xf32>
    %34 = vector.extract_strided_slice %22 {offsets = [0, 64], sizes = [8, 32], strides = [1, 1]} : vector<8x96xf32> to vector<8x32xf32>
    %35 = vector.extract_strided_slice %23 {offsets = [0, 64], sizes = [8, 32], strides = [1, 1]} : vector<8x96xf32> to vector<8x32xf32>
    %36 = arith.addf %35, %10 : vector<8x32xf32>
    %37 = arith.mulf %32, %36 : vector<8x32xf32>
    %38 = arith.addf %34, %37 : vector<8x32xf32>
    %39 = math.tanh %38 : vector<8x32xf32>
    %cst_18 = arith.constant 1.000000e+00 : f32
    %40 = vector.broadcast %cst_18 : f32 to vector<8x32xf32>
    %41 = arith.subf %40, %33 : vector<8x32xf32>
    %42 = arith.mulf %41, %39 : vector<8x32xf32>
    %43 = arith.mulf %33, %17 : vector<8x32xf32>
    %44 = arith.addf %42, %43 : vector<8x32xf32>
    %45 = vector.broadcast %19 : i32 to vector<8x32xi32>
    %46 = arith.cmpi sgt, %5, %45 : vector<8x32xi32>
    %47 = arith.select %46, %44, %17 : vector<8x32xi1>, vector<8x32xf32>
    %c3_i32 = arith.constant 3 : i32
    %48 = arith.subi %c3_i32, %c0_i32_14 : i32
    %49 = arith.addi %16, %48 : i32
    %50 = arith.index_cast %48 : i32 to index
    %c0_19 = arith.constant 0 : index
    %c0_20 = arith.constant 0 : index
    %51 = vector.load %arg4[%50, %c0_19, %c0_20] : memref<4x8x96xf32, #tpu.memory_space<vmem>>, vector<1x8x96xf32>
    %52 = vector.shape_cast %51 : vector<1x8x96xf32> to vector<8x96xf32>
    %cst_21 = arith.constant dense<0.000000e+00> : vector<8x96xf32>
    %53 = tpu.matmul %18, %7, %cst_21 {dimension_numbers = #tpu.dot_dimension_numbers<[1], [0], [0], [1], [0, 0, 1, 1], [], []>} : vector<8x32xf32>, vector<32x96xf32>, vector<8x96xf32> -> vector<8x96xf32>
    %54 = vector.extract_strided_slice %52 {offsets = [0, 0], sizes = [8, 64], strides = [1, 1]} : vector<8x96xf32> to vector<8x64xf32>
    %55 = vector.extract_strided_slice %53 {offsets = [0, 0], sizes = [8, 64], strides = [1, 1]} : vector<8x96xf32> to vector<8x64xf32>
    %56 = arith.addf %54, %55 : vector<8x64xf32>
    %57 = arith.negf %56 : vector<8x64xf32>
    %58 = math.exp %57 : vector<8x64xf32>
    %cst_22 = arith.constant 1.000000e+00 : f32
    %59 = vector.broadcast %cst_22 : f32 to vector<8x64xf32>
    %60 = arith.addf %59, %58 : vector<8x64xf32>
    %61 = arith.divf %59, %60 : vector<8x64xf32>
    %62 = vector.extract_strided_slice %61 {offsets = [0, 0], sizes = [8, 32], strides = [1, 1]} : vector<8x64xf32> to vector<8x32xf32>
    %63 = vector.extract_strided_slice %61 {offsets = [0, 32], sizes = [8, 32], strides = [1, 1]} : vector<8x64xf32> to vector<8x32xf32>
    %64 = vector.extract_strided_slice %52 {offsets = [0, 64], sizes = [8, 32], strides = [1, 1]} : vector<8x96xf32> to vector<8x32xf32>
    %65 = vector.extract_strided_slice %53 {offsets = [0, 64], sizes = [8, 32], strides = [1, 1]} : vector<8x96xf32> to vector<8x32xf32>
    %66 = arith.addf %65, %13 : vector<8x32xf32>
    %67 = arith.mulf %62, %66 : vector<8x32xf32>
    %68 = arith.addf %64, %67 : vector<8x32xf32>
    %69 = math.tanh %68 : vector<8x32xf32>
    %cst_23 = arith.constant 1.000000e+00 : f32
    %70 = vector.broadcast %cst_23 : f32 to vector<8x32xf32>
    %71 = arith.subf %70, %63 : vector<8x32xf32>
    %72 = arith.mulf %71, %69 : vector<8x32xf32>
    %73 = arith.mulf %63, %18 : vector<8x32xf32>
    %74 = arith.addf %72, %73 : vector<8x32xf32>
    %75 = vector.broadcast %49 : i32 to vector<8x32xi32>
    %76 = arith.cmpi sgt, %5, %75 : vector<8x32xi32>
    %77 = arith.select %76, %74, %18 : vector<8x32xi1>, vector<8x32xf32>
    %c1_i32_24 = arith.constant 1 : i32
    %78 = arith.addi %14, %c1_i32_24 : i32
    %79 = arith.index_cast %c1_i32_24 : i32 to index
    %c0_25 = arith.constant 0 : index
    %c0_26 = arith.constant 0 : index
    %80 = vector.load %arg3[%79, %c0_25, %c0_26] : memref<4x8x96xf32, #tpu.memory_space<vmem>>, vector<1x8x96xf32>
    %81 = vector.shape_cast %80 : vector<1x8x96xf32> to vector<8x96xf32>
    %cst_27 = arith.constant dense<0.000000e+00> : vector<8x96xf32>
    %82 = tpu.matmul %47, %6, %cst_27 {dimension_numbers = #tpu.dot_dimension_numbers<[1], [0], [0], [1], [0, 0, 1, 1], [], []>} : vector<8x32xf32>, vector<32x96xf32>, vector<8x96xf32> -> vector<8x96xf32>
    %83 = vector.extract_strided_slice %81 {offsets = [0, 0], sizes = [8, 64], strides = [1, 1]} : vector<8x96xf32> to vector<8x64xf32>
    %84 = vector.extract_strided_slice %82 {offsets = [0, 0], sizes = [8, 64], strides = [1, 1]} : vector<8x96xf32> to vector<8x64xf32>
    %85 = arith.addf %83, %84 : vector<8x64xf32>
    %86 = arith.negf %85 : vector<8x64xf32>
    %87 = math.exp %86 : vector<8x64xf32>
    %cst_28 = arith.constant 1.000000e+00 : f32
    %88 = vector.broadcast %cst_28 : f32 to vector<8x64xf32>
    %89 = arith.addf %88, %87 : vector<8x64xf32>
    %90 = arith.divf %88, %89 : vector<8x64xf32>
    %91 = vector.extract_strided_slice %90 {offsets = [0, 0], sizes = [8, 32], strides = [1, 1]} : vector<8x64xf32> to vector<8x32xf32>
    %92 = vector.extract_strided_slice %90 {offsets = [0, 32], sizes = [8, 32], strides = [1, 1]} : vector<8x64xf32> to vector<8x32xf32>
    %93 = vector.extract_strided_slice %81 {offsets = [0, 64], sizes = [8, 32], strides = [1, 1]} : vector<8x96xf32> to vector<8x32xf32>
    %94 = vector.extract_strided_slice %82 {offsets = [0, 64], sizes = [8, 32], strides = [1, 1]} : vector<8x96xf32> to vector<8x32xf32>
    %95 = arith.addf %94, %10 : vector<8x32xf32>
    %96 = arith.mulf %91, %95 : vector<8x32xf32>
    %97 = arith.addf %93, %96 : vector<8x32xf32>
    %98 = math.tanh %97 : vector<8x32xf32>
    %cst_29 = arith.constant 1.000000e+00 : f32
    %99 = vector.broadcast %cst_29 : f32 to vector<8x32xf32>
    %100 = arith.subf %99, %92 : vector<8x32xf32>
    %101 = arith.mulf %100, %98 : vector<8x32xf32>
    %102 = arith.mulf %92, %47 : vector<8x32xf32>
    %103 = arith.addf %101, %102 : vector<8x32xf32>
    %104 = vector.broadcast %78 : i32 to vector<8x32xi32>
    %105 = arith.cmpi sgt, %5, %104 : vector<8x32xi32>
    %106 = arith.select %105, %103, %47 : vector<8x32xi1>, vector<8x32xf32>
    %c3_i32_30 = arith.constant 3 : i32
    %107 = arith.subi %c3_i32_30, %c1_i32_24 : i32
    %108 = arith.addi %16, %107 : i32
    %109 = arith.index_cast %107 : i32 to index
    %c0_31 = arith.constant 0 : index
    %c0_32 = arith.constant 0 : index
    %110 = vector.load %arg4[%109, %c0_31, %c0_32] : memref<4x8x96xf32, #tpu.memory_space<vmem>>, vector<1x8x96xf32>
    %111 = vector.shape_cast %110 : vector<1x8x96xf32> to vector<8x96xf32>
    %cst_33 = arith.constant dense<0.000000e+00> : vector<8x96xf32>
    %112 = tpu.matmul %77, %7, %cst_33 {dimension_numbers = #tpu.dot_dimension_numbers<[1], [0], [0], [1], [0, 0, 1, 1], [], []>} : vector<8x32xf32>, vector<32x96xf32>, vector<8x96xf32> -> vector<8x96xf32>
    %113 = vector.extract_strided_slice %111 {offsets = [0, 0], sizes = [8, 64], strides = [1, 1]} : vector<8x96xf32> to vector<8x64xf32>
    %114 = vector.extract_strided_slice %112 {offsets = [0, 0], sizes = [8, 64], strides = [1, 1]} : vector<8x96xf32> to vector<8x64xf32>
    %115 = arith.addf %113, %114 : vector<8x64xf32>
    %116 = arith.negf %115 : vector<8x64xf32>
    %117 = math.exp %116 : vector<8x64xf32>
    %cst_34 = arith.constant 1.000000e+00 : f32
    %118 = vector.broadcast %cst_34 : f32 to vector<8x64xf32>
    %119 = arith.addf %118, %117 : vector<8x64xf32>
    %120 = arith.divf %118, %119 : vector<8x64xf32>
    %121 = vector.extract_strided_slice %120 {offsets = [0, 0], sizes = [8, 32], strides = [1, 1]} : vector<8x64xf32> to vector<8x32xf32>
    %122 = vector.extract_strided_slice %120 {offsets = [0, 32], sizes = [8, 32], strides = [1, 1]} : vector<8x64xf32> to vector<8x32xf32>
    %123 = vector.extract_strided_slice %111 {offsets = [0, 64], sizes = [8, 32], strides = [1, 1]} : vector<8x96xf32> to vector<8x32xf32>
    %124 = vector.extract_strided_slice %112 {offsets = [0, 64], sizes = [8, 32], strides = [1, 1]} : vector<8x96xf32> to vector<8x32xf32>
    %125 = arith.addf %124, %13 : vector<8x32xf32>
    %126 = arith.mulf %121, %125 : vector<8x32xf32>
    %127 = arith.addf %123, %126 : vector<8x32xf32>
    %128 = math.tanh %127 : vector<8x32xf32>
    %cst_35 = arith.constant 1.000000e+00 : f32
    %129 = vector.broadcast %cst_35 : f32 to vector<8x32xf32>
    %130 = arith.subf %129, %122 : vector<8x32xf32>
    %131 = arith.mulf %130, %128 : vector<8x32xf32>
    %132 = arith.mulf %122, %77 : vector<8x32xf32>
    %133 = arith.addf %131, %132 : vector<8x32xf32>
    %134 = vector.broadcast %108 : i32 to vector<8x32xi32>
    %135 = arith.cmpi sgt, %5, %134 : vector<8x32xi32>
    %136 = arith.select %135, %133, %77 : vector<8x32xi1>, vector<8x32xf32>
    %c2_i32 = arith.constant 2 : i32
    %137 = arith.addi %14, %c2_i32 : i32
    %138 = arith.index_cast %c2_i32 : i32 to index
    %c0_36 = arith.constant 0 : index
    %c0_37 = arith.constant 0 : index
    %139 = vector.load %arg3[%138, %c0_36, %c0_37] : memref<4x8x96xf32, #tpu.memory_space<vmem>>, vector<1x8x96xf32>
    %140 = vector.shape_cast %139 : vector<1x8x96xf32> to vector<8x96xf32>
    %cst_38 = arith.constant dense<0.000000e+00> : vector<8x96xf32>
    %141 = tpu.matmul %106, %6, %cst_38 {dimension_numbers = #tpu.dot_dimension_numbers<[1], [0], [0], [1], [0, 0, 1, 1], [], []>} : vector<8x32xf32>, vector<32x96xf32>, vector<8x96xf32> -> vector<8x96xf32>
    %142 = vector.extract_strided_slice %140 {offsets = [0, 0], sizes = [8, 64], strides = [1, 1]} : vector<8x96xf32> to vector<8x64xf32>
    %143 = vector.extract_strided_slice %141 {offsets = [0, 0], sizes = [8, 64], strides = [1, 1]} : vector<8x96xf32> to vector<8x64xf32>
    %144 = arith.addf %142, %143 : vector<8x64xf32>
    %145 = arith.negf %144 : vector<8x64xf32>
    %146 = math.exp %145 : vector<8x64xf32>
    %cst_39 = arith.constant 1.000000e+00 : f32
    %147 = vector.broadcast %cst_39 : f32 to vector<8x64xf32>
    %148 = arith.addf %147, %146 : vector<8x64xf32>
    %149 = arith.divf %147, %148 : vector<8x64xf32>
    %150 = vector.extract_strided_slice %149 {offsets = [0, 0], sizes = [8, 32], strides = [1, 1]} : vector<8x64xf32> to vector<8x32xf32>
    %151 = vector.extract_strided_slice %149 {offsets = [0, 32], sizes = [8, 32], strides = [1, 1]} : vector<8x64xf32> to vector<8x32xf32>
    %152 = vector.extract_strided_slice %140 {offsets = [0, 64], sizes = [8, 32], strides = [1, 1]} : vector<8x96xf32> to vector<8x32xf32>
    %153 = vector.extract_strided_slice %141 {offsets = [0, 64], sizes = [8, 32], strides = [1, 1]} : vector<8x96xf32> to vector<8x32xf32>
    %154 = arith.addf %153, %10 : vector<8x32xf32>
    %155 = arith.mulf %150, %154 : vector<8x32xf32>
    %156 = arith.addf %152, %155 : vector<8x32xf32>
    %157 = math.tanh %156 : vector<8x32xf32>
    %cst_40 = arith.constant 1.000000e+00 : f32
    %158 = vector.broadcast %cst_40 : f32 to vector<8x32xf32>
    %159 = arith.subf %158, %151 : vector<8x32xf32>
    %160 = arith.mulf %159, %157 : vector<8x32xf32>
    %161 = arith.mulf %151, %106 : vector<8x32xf32>
    %162 = arith.addf %160, %161 : vector<8x32xf32>
    %163 = vector.broadcast %137 : i32 to vector<8x32xi32>
    %164 = arith.cmpi sgt, %5, %163 : vector<8x32xi32>
    %165 = arith.select %164, %162, %106 : vector<8x32xi1>, vector<8x32xf32>
    %c3_i32_41 = arith.constant 3 : i32
    %166 = arith.subi %c3_i32_41, %c2_i32 : i32
    %167 = arith.addi %16, %166 : i32
    %168 = arith.index_cast %166 : i32 to index
    %c0_42 = arith.constant 0 : index
    %c0_43 = arith.constant 0 : index
    %169 = vector.load %arg4[%168, %c0_42, %c0_43] : memref<4x8x96xf32, #tpu.memory_space<vmem>>, vector<1x8x96xf32>
    %170 = vector.shape_cast %169 : vector<1x8x96xf32> to vector<8x96xf32>
    %cst_44 = arith.constant dense<0.000000e+00> : vector<8x96xf32>
    %171 = tpu.matmul %136, %7, %cst_44 {dimension_numbers = #tpu.dot_dimension_numbers<[1], [0], [0], [1], [0, 0, 1, 1], [], []>} : vector<8x32xf32>, vector<32x96xf32>, vector<8x96xf32> -> vector<8x96xf32>
    %172 = vector.extract_strided_slice %170 {offsets = [0, 0], sizes = [8, 64], strides = [1, 1]} : vector<8x96xf32> to vector<8x64xf32>
    %173 = vector.extract_strided_slice %171 {offsets = [0, 0], sizes = [8, 64], strides = [1, 1]} : vector<8x96xf32> to vector<8x64xf32>
    %174 = arith.addf %172, %173 : vector<8x64xf32>
    %175 = arith.negf %174 : vector<8x64xf32>
    %176 = math.exp %175 : vector<8x64xf32>
    %cst_45 = arith.constant 1.000000e+00 : f32
    %177 = vector.broadcast %cst_45 : f32 to vector<8x64xf32>
    %178 = arith.addf %177, %176 : vector<8x64xf32>
    %179 = arith.divf %177, %178 : vector<8x64xf32>
    %180 = vector.extract_strided_slice %179 {offsets = [0, 0], sizes = [8, 32], strides = [1, 1]} : vector<8x64xf32> to vector<8x32xf32>
    %181 = vector.extract_strided_slice %179 {offsets = [0, 32], sizes = [8, 32], strides = [1, 1]} : vector<8x64xf32> to vector<8x32xf32>
    %182 = vector.extract_strided_slice %170 {offsets = [0, 64], sizes = [8, 32], strides = [1, 1]} : vector<8x96xf32> to vector<8x32xf32>
    %183 = vector.extract_strided_slice %171 {offsets = [0, 64], sizes = [8, 32], strides = [1, 1]} : vector<8x96xf32> to vector<8x32xf32>
    %184 = arith.addf %183, %13 : vector<8x32xf32>
    %185 = arith.mulf %180, %184 : vector<8x32xf32>
    %186 = arith.addf %182, %185 : vector<8x32xf32>
    %187 = math.tanh %186 : vector<8x32xf32>
    %cst_46 = arith.constant 1.000000e+00 : f32
    %188 = vector.broadcast %cst_46 : f32 to vector<8x32xf32>
    %189 = arith.subf %188, %181 : vector<8x32xf32>
    %190 = arith.mulf %189, %187 : vector<8x32xf32>
    %191 = arith.mulf %181, %136 : vector<8x32xf32>
    %192 = arith.addf %190, %191 : vector<8x32xf32>
    %193 = vector.broadcast %167 : i32 to vector<8x32xi32>
    %194 = arith.cmpi sgt, %5, %193 : vector<8x32xi32>
    %195 = arith.select %194, %192, %136 : vector<8x32xi1>, vector<8x32xf32>
    %c3_i32_47 = arith.constant 3 : i32
    %196 = arith.addi %14, %c3_i32_47 : i32
    %197 = arith.index_cast %c3_i32_47 : i32 to index
    %c0_48 = arith.constant 0 : index
    %c0_49 = arith.constant 0 : index
    %198 = vector.load %arg3[%197, %c0_48, %c0_49] : memref<4x8x96xf32, #tpu.memory_space<vmem>>, vector<1x8x96xf32>
    %199 = vector.shape_cast %198 : vector<1x8x96xf32> to vector<8x96xf32>
    %cst_50 = arith.constant dense<0.000000e+00> : vector<8x96xf32>
    %200 = tpu.matmul %165, %6, %cst_50 {dimension_numbers = #tpu.dot_dimension_numbers<[1], [0], [0], [1], [0, 0, 1, 1], [], []>} : vector<8x32xf32>, vector<32x96xf32>, vector<8x96xf32> -> vector<8x96xf32>
    %201 = vector.extract_strided_slice %199 {offsets = [0, 0], sizes = [8, 64], strides = [1, 1]} : vector<8x96xf32> to vector<8x64xf32>
    %202 = vector.extract_strided_slice %200 {offsets = [0, 0], sizes = [8, 64], strides = [1, 1]} : vector<8x96xf32> to vector<8x64xf32>
    %203 = arith.addf %201, %202 : vector<8x64xf32>
    %204 = arith.negf %203 : vector<8x64xf32>
    %205 = math.exp %204 : vector<8x64xf32>
    %cst_51 = arith.constant 1.000000e+00 : f32
    %206 = vector.broadcast %cst_51 : f32 to vector<8x64xf32>
    %207 = arith.addf %206, %205 : vector<8x64xf32>
    %208 = arith.divf %206, %207 : vector<8x64xf32>
    %209 = vector.extract_strided_slice %208 {offsets = [0, 0], sizes = [8, 32], strides = [1, 1]} : vector<8x64xf32> to vector<8x32xf32>
    %210 = vector.extract_strided_slice %208 {offsets = [0, 32], sizes = [8, 32], strides = [1, 1]} : vector<8x64xf32> to vector<8x32xf32>
    %211 = vector.extract_strided_slice %199 {offsets = [0, 64], sizes = [8, 32], strides = [1, 1]} : vector<8x96xf32> to vector<8x32xf32>
    %212 = vector.extract_strided_slice %200 {offsets = [0, 64], sizes = [8, 32], strides = [1, 1]} : vector<8x96xf32> to vector<8x32xf32>
    %213 = arith.addf %212, %10 : vector<8x32xf32>
    %214 = arith.mulf %209, %213 : vector<8x32xf32>
    %215 = arith.addf %211, %214 : vector<8x32xf32>
    %216 = math.tanh %215 : vector<8x32xf32>
    %cst_52 = arith.constant 1.000000e+00 : f32
    %217 = vector.broadcast %cst_52 : f32 to vector<8x32xf32>
    %218 = arith.subf %217, %210 : vector<8x32xf32>
    %219 = arith.mulf %218, %216 : vector<8x32xf32>
    %220 = arith.mulf %210, %165 : vector<8x32xf32>
    %221 = arith.addf %219, %220 : vector<8x32xf32>
    %222 = vector.broadcast %196 : i32 to vector<8x32xi32>
    %223 = arith.cmpi sgt, %5, %222 : vector<8x32xi32>
    %224 = arith.select %223, %221, %165 : vector<8x32xi1>, vector<8x32xf32>
    %c3_i32_53 = arith.constant 3 : i32
    %225 = arith.subi %c3_i32_53, %c3_i32_47 : i32
    %226 = arith.addi %16, %225 : i32
    %227 = arith.index_cast %225 : i32 to index
    %c0_54 = arith.constant 0 : index
    %c0_55 = arith.constant 0 : index
    %228 = vector.load %arg4[%227, %c0_54, %c0_55] : memref<4x8x96xf32, #tpu.memory_space<vmem>>, vector<1x8x96xf32>
    %229 = vector.shape_cast %228 : vector<1x8x96xf32> to vector<8x96xf32>
    %cst_56 = arith.constant dense<0.000000e+00> : vector<8x96xf32>
    %230 = tpu.matmul %195, %7, %cst_56 {dimension_numbers = #tpu.dot_dimension_numbers<[1], [0], [0], [1], [0, 0, 1, 1], [], []>} : vector<8x32xf32>, vector<32x96xf32>, vector<8x96xf32> -> vector<8x96xf32>
    %231 = vector.extract_strided_slice %229 {offsets = [0, 0], sizes = [8, 64], strides = [1, 1]} : vector<8x96xf32> to vector<8x64xf32>
    %232 = vector.extract_strided_slice %230 {offsets = [0, 0], sizes = [8, 64], strides = [1, 1]} : vector<8x96xf32> to vector<8x64xf32>
    %233 = arith.addf %231, %232 : vector<8x64xf32>
    %234 = arith.negf %233 : vector<8x64xf32>
    %235 = math.exp %234 : vector<8x64xf32>
    %cst_57 = arith.constant 1.000000e+00 : f32
    %236 = vector.broadcast %cst_57 : f32 to vector<8x64xf32>
    %237 = arith.addf %236, %235 : vector<8x64xf32>
    %238 = arith.divf %236, %237 : vector<8x64xf32>
    %239 = vector.extract_strided_slice %238 {offsets = [0, 0], sizes = [8, 32], strides = [1, 1]} : vector<8x64xf32> to vector<8x32xf32>
    %240 = vector.extract_strided_slice %238 {offsets = [0, 32], sizes = [8, 32], strides = [1, 1]} : vector<8x64xf32> to vector<8x32xf32>
    %241 = vector.extract_strided_slice %229 {offsets = [0, 64], sizes = [8, 32], strides = [1, 1]} : vector<8x96xf32> to vector<8x32xf32>
    %242 = vector.extract_strided_slice %230 {offsets = [0, 64], sizes = [8, 32], strides = [1, 1]} : vector<8x96xf32> to vector<8x32xf32>
    %243 = arith.addf %242, %13 : vector<8x32xf32>
    %244 = arith.mulf %239, %243 : vector<8x32xf32>
    %245 = arith.addf %241, %244 : vector<8x32xf32>
    %246 = math.tanh %245 : vector<8x32xf32>
    %cst_58 = arith.constant 1.000000e+00 : f32
    %247 = vector.broadcast %cst_58 : f32 to vector<8x32xf32>
    %248 = arith.subf %247, %240 : vector<8x32xf32>
    %249 = arith.mulf %248, %246 : vector<8x32xf32>
    %250 = arith.mulf %240, %195 : vector<8x32xf32>
    %251 = arith.addf %249, %250 : vector<8x32xf32>
    %252 = vector.broadcast %226 : i32 to vector<8x32xi32>
    %253 = arith.cmpi sgt, %5, %252 : vector<8x32xi32>
    %254 = arith.select %253, %251, %195 : vector<8x32xi1>, vector<8x32xf32>
    %c4_i32_59 = arith.constant 4 : i32
    %c0_60 = arith.constant 0 : index
    %c0_61 = arith.constant 0 : index
    %255 = vector.load %arg10[%c0_60, %c0_61] : memref<8x64xf32, #tpu.memory_space<vmem>>, vector<8x32xf32>
    tpu.vector_store %arg10[%c0_60, %c0_61], %224 {strides = array<i32>} : memref<8x64xf32, #tpu.memory_space<vmem>>, vector<8x32xf32>,
    %c0_62 = arith.constant 0 : index
    %c32_63 = arith.constant 32 : index
    %256 = vector.load %arg10[%c0_62, %c32_63] : memref<8x64xf32, #tpu.memory_space<vmem>>, vector<8x32xf32>
    tpu.vector_store %arg10[%c0_62, %c32_63], %254 {strides = array<i32>} : memref<8x64xf32, #tpu.memory_space<vmem>>, vector<8x32xf32>,
    %c1_i32_64 = arith.constant 1 : i32
    %257 = arith.cmpi eq, %arg1, %c1_i32_64 : i32
    %258 = arith.extui %257 : i1 to i32
    %c0_i32_65 = arith.constant 0 : i32
    %259 = arith.cmpi ne, %258, %c0_i32_65 : i32
    scf.if %259 {
      %c0_66 = arith.constant 0 : index
      %c0_67 = arith.constant 0 : index
      %260 = vector.load %arg10[%c0_66, %c0_67] : memref<8x64xf32, #tpu.memory_space<vmem>>, vector<8x64xf32>
      %c0_68 = arith.constant 0 : index
      %c0_69 = arith.constant 0 : index
      %261 = vector.load %arg9[%c0_68, %c0_69] : memref<8x64xf32, #tpu.memory_space<vmem>>, vector<8x64xf32>
      tpu.vector_store %arg9[%c0_68, %c0_69], %260 {strides = array<i32>} : memref<8x64xf32, #tpu.memory_space<vmem>>, vector<8x64xf32>,
    } else {
    }
    return
  }
  func.func @transform_0(%arg0: i32, %arg1: i32) -> (i32, i32) {
    %c0_i32 = arith.constant 0 : i32
    %c0_i32_0 = arith.constant 0 : i32
    return %arg0, %c0_i32 : i32, i32
  }
  func.func @transform_1(%arg0: i32, %arg1: i32) -> (i32, i32, i32) {
    %c0_i32 = arith.constant 0 : i32
    %c0_i32_0 = arith.constant 0 : i32
    return %arg1, %arg0, %c0_i32 : i32, i32, i32
  }
  func.func @transform_2(%arg0: i32, %arg1: i32) -> (i32, i32, i32) {
    %c1_i32 = arith.constant 1 : i32
    %0 = arith.subi %c1_i32, %arg1 : i32
    %c0_i32 = arith.constant 0 : i32
    %c0_i32_0 = arith.constant 0 : i32
    return %0, %arg0, %c0_i32 : i32, i32, i32
  }
  func.func @transform_3(%arg0: i32, %arg1: i32) -> (i32, i32) {
    %c0_i32 = arith.constant 0 : i32
    %c0_i32_0 = arith.constant 0 : i32
    %c0_i32_1 = arith.constant 0 : i32
    return %c0_i32, %c0_i32_0 : i32, i32
  }
  func.func @transform_4(%arg0: i32, %arg1: i32) -> (i32, i32) {
    %c0_i32 = arith.constant 0 : i32
    %c0_i32_0 = arith.constant 0 : i32
    %c0_i32_1 = arith.constant 0 : i32
    return %c0_i32, %c0_i32_0 : i32, i32
  }
  func.func @transform_5(%arg0: i32, %arg1: i32) -> (i32, i32) {
    %c0_i32 = arith.constant 0 : i32
    %c0_i32_0 = arith.constant 0 : i32
    %c0_i32_1 = arith.constant 0 : i32
    return %c0_i32, %c0_i32_0 : i32, i32
  }
  func.func @transform_6(%arg0: i32, %arg1: i32) -> (i32, i32) {
    %c0_i32 = arith.constant 0 : i32
    %c0_i32_0 = arith.constant 0 : i32
    %c0_i32_1 = arith.constant 0 : i32
    return %c0_i32, %c0_i32_0 : i32, i32
  }
  func.func @transform_7(%arg0: i32, %arg1: i32) -> (i32, i32) {
    %c0_i32 = arith.constant 0 : i32
    %c0_i32_0 = arith.constant 0 : i32
    return %arg0, %c0_i32 : i32, i32
  }
}

</mosaic_0001>

<llo_original>
// kernel: tpu_custom_call.1
$region0: #{tpu_custom_call.1}
  #allocation0 [shape = 'u32[]', space=smem, size = 0x4, offset = 0x4, fixed_abs, tag = 'smem constant byte address 0x4 - core index']
  #allocation1 [shape = 'u32[144,128]{1,0:T(1,128)}', space=vmem, size = 0x12000, scoped, tag = 'internal scratch']
  #allocation2 [shape = 'f32[8,64]{1,0:T(8,128)}', space=vmem, size = 0x1000, scoped, tag = 'scratch operand']
  %s0 = inlined_call_operand.vmem [shape: s32[8,1], index: 0, kind: input, shape index: {}]
  %s1 = inlined_call_operand.hbm [shape: f32[8,8,96], index: 1, kind: input, shape index: {}]
  %s2 = inlined_call_operand.hbm [shape: f32[8,8,96], index: 2, kind: input, shape index: {}]
  %s3 = inlined_call_operand.hbm [shape: f32[32,96], index: 3, kind: input, shape index: {}]
  %s4 = inlined_call_operand.hbm [shape: f32[32,96], index: 4, kind: input, shape index: {}]
  %s5 = inlined_call_operand.vmem [shape: f32[1,32], index: 5, kind: input, shape index: {}]
  %s6 = inlined_call_operand.vmem [shape: f32[1,32], index: 6, kind: input, shape index: {}]
  %s7 = inlined_call_operand.hbm [shape: f32[8,64], index: 7, kind: output, shape index: {}]
  %s8 = sld [smem:[#allocation0]]
  $region85: #{tpu_custom_call.1} parent=0
    _
  %s10 = ssub.s32 1, %s8
  %s11 = scalar_select 0, %s10, %s8
  $region1: #{tpu_custom_call.1} parent=0
    #allocation3 [shape = 'u8[32768]{0}', space=vmem, size = 0x8000, scoped, tag = 'input window, operand 1']
    #allocation4 [shape = 's32[2]{0}', space=sflag, size = 0x8, scoped, tag = 'scoped memory for tpu_custom_call.1']
    #allocation5 [shape = 's32[2]{0}', space=sflag, size = 0x8, scoped, tag = 'scoped memory for tpu_custom_call.1']
    #allocation6 [shape = 'u8[32768]{0}', space=vmem, size = 0x8000, scoped, tag = 'input window, operand 2']
    #allocation7 [shape = 's32[2]{0}', space=sflag, size = 0x8, scoped, tag = 'scoped memory for tpu_custom_call.1']
    #allocation8 [shape = 'u8[16384]{0}', space=vmem, size = 0x4000, scoped, tag = 'input window, operand 3, single buffered']
    #allocation9 [shape = 'u8[16384]{0}', space=vmem, size = 0x4000, scoped, tag = 'input window, operand 4, single buffered']
    #allocation10 [shape = 's32[1]{0}', space=sflag, size = 0x4, scoped, tag = 'scoped memory for tpu_custom_call.1']
    #allocation11 [shape = 'u8[4096]{0}', space=vmem, size = 0x1000, scoped, tag = 'output window, operand 0, single buffered']
    %12 = vsyncpa [#allocation4], 0
    %s13 = scalar_lea.sflag [#allocation4], 1
    %14 = vsyncpa %s13, 0
    %15 = vsyncpa [#allocation7], 0
    %s16 = scalar_lea.sflag [#allocation7], 1
    %17 = vsyncpa %s16, 0
    %18 = vsyncpa [#allocation10], 0
    %19 = vsyncpa [#allocation5], 0
    loop: start=0, step=1, limit=4
    $region2: #{tpu_custom_call.1} parent=1 // loop_pre_header
      _
    $region3: #{tpu_custom_call.1} parent=1 // loop_header
      %s21 = sphi 0, %s25
      %p22 = scmp.ge.s32.totalorder %s21, 4
      %s28 = sphi 0, %s40
      %s29 = sphi 0, %s36
      %s30 = sphi 0, %s28
      %s31 = sphi 0, %s29
      %s32 = sphi 0, %s30
      %s33 = sphi 0, %s31
      %s43 = sphi 0, %s45
      %s46 = sphi 0, %s43
      %s47 = sphi 0, %s46
      %s63 = sphi 0, %s47
      %s71 = sphi 0, %s73
      %s74 = sphi 0, %s71
      %s75 = sphi 0, %s74
      %s91 = sphi 0, %s75
      %s101 = sphi 0, %s103
      %s104 = sphi 0, %s101
      %s105 = sphi 0, %s104
      %s121 = sphi 0, %s105
      %s125 = sphi 0, %s125
      %s127 = sphi 0, %s125
      %s128 = sphi 0, %s127
      %s142 = sphi 0, %s128
      %s146 = sphi 0, %s146
      %s148 = sphi 0, %s146
      %s149 = sphi 0, %s148
      %s163 = sphi 0, %s149
      %s167 = sphi 0, %s167
      %s169 = sphi 0, %s167
      %s170 = sphi 0, %s169
      %s184 = sphi 0, %s170
      %s188 = sphi 0, %s188
      %s190 = sphi 0, %s188
      %s191 = sphi 0, %s190
      %s205 = sphi 0, %s191
      %s211 = sphi 0, %s213
      %s214 = sphi 0, %s211
      %s215 = sphi 0, %s214
      %s231 = sphi 0, %s215
    $region4: #{tpu_custom_call.1} parent=1 // loop_header_branch
      %24 = sbr.rel (%p22) target = $region8
    $region5: #{tpu_custom_call.1} parent=1 // loop_body
      %s26 = ssub.s32 %s21, 1
      %s27 = ssub.s32 %s21, 2
      %s34 = sadd.s32 1, %s29
      %p35 = scmp.ge.s32.totalorder %s34, 2
      %s36 = scalar_select %p35, 0, %s34
      %s37 = sadd.s32 1, %s28
      %s38 = scalar_select %p35, %s37, %s28
      %p39 = scmp.ge.s32.totalorder %s38, 1
      %s40 = scalar_select %p39, 0, %s38
      %s41 = ssub.s32 %s28, %s40
      %p42 = scmp.eq.s32.totalorder %s41, 0
      %s44 = sadd.s32 %s43, 1
      %s45 = scalar_select %p42, %s43, %s44
      %p48 = pneg %p42
      %p49 = scmp.eq.s32.totalorder %s21, 1
      %p50 = por %p48, %p49
      %p51 = scmp.ne.s32.totalorder %s43, %s46
      %p52 = scmp.eq.s32.totalorder %s21, 0
      %p53 = por %p51, %p52
      %p54 = scmp.ne.s32.totalorder %s43, %s46
      %p55 = scmp.eq.s32.totalorder %s26, 1
      %p56 = por %p54, %p55
      %p57 = scmp.ne.s32.totalorder %s46, %s47
      %p58 = scmp.eq.s32.totalorder %s26, 0
      %p59 = por %p57, %p58
      %p60 = scmp.ne.s32.totalorder %s46, %s47
      %p61 = scmp.eq.s32.totalorder %s27, 1
      %p62 = por %p60, %p61
      %p64 = scmp.ne.s32.totalorder %s47, %s63
      %p65 = scmp.eq.s32.totalorder %s27, 0
      %p66 = por %p64, %p65
      %s67 = ssub.s32 %s29, %s36
      %s68 = ssub.s32 %s28, %s40
      %s69 = sor.u32 %s67, %s68
      %p70 = scmp.eq.s32.totalorder %s69, 0
      %s72 = sadd.s32 %s71, 1
      %s73 = scalar_select %p70, %s71, %s72
      %p76 = pneg %p70
      %p77 = scmp.eq.s32.totalorder %s21, 1
      %p78 = por %p76, %p77
      %p79 = scmp.ne.s32.totalorder %s71, %s74
      %p80 = scmp.eq.s32.totalorder %s21, 0
      %p81 = por %p79, %p80
      %p82 = scmp.ne.s32.totalorder %s71, %s74
      %p83 = scmp.eq.s32.totalorder %s26, 1
      %p84 = por %p82, %p83
      %p85 = scmp.ne.s32.totalorder %s74, %s75
      %p86 = scmp.eq.s32.totalorder %s26, 0
      %p87 = por %p85, %p86
      %p88 = scmp.ne.s32.totalorder %s74, %s75
      %p89 = scmp.eq.s32.totalorder %s27, 1
      %p90 = por %p88, %p89
      %p92 = scmp.ne.s32.totalorder %s75, %s91
      %p93 = scmp.eq.s32.totalorder %s27, 0
      %p94 = por %p92, %p93
      %s95 = ssub.s32 1, %s29
      %s96 = ssub.s32 1, %s36
      %s97 = ssub.s32 %s95, %s96
      %s98 = ssub.s32 %s28, %s40
      %s99 = sor.u32 %s97, %s98
      %p100 = scmp.eq.s32.totalorder %s99, 0
      %s102 = sadd.s32 %s101, 1
      %s103 = scalar_select %p100, %s101, %s102
      %p106 = pneg %p100
      %p107 = scmp.eq.s32.totalorder %s21, 1
      %p108 = por %p106, %p107
      %p109 = scmp.ne.s32.totalorder %s101, %s104
      %p110 = scmp.eq.s32.totalorder %s21, 0
      %p111 = por %p109, %p110
      %p112 = scmp.ne.s32.totalorder %s101, %s104
      %p113 = scmp.eq.s32.totalorder %s26, 1
      %p114 = por %p112, %p113
      %p115 = scmp.ne.s32.totalorder %s104, %s105
      %p116 = scmp.eq.s32.totalorder %s26, 0
      %p117 = por %p115, %p116
      %p118 = scmp.ne.s32.totalorder %s104, %s105
      %p119 = scmp.eq.s32.totalorder %s27, 1
      %p120 = por %p118, %p119
      %p122 = scmp.ne.s32.totalorder %s105, %s121
      %p123 = scmp.eq.s32.totalorder %s27, 0
      %p124 = por %p122, %p123
      %s126 = sadd.s32 %s125, 1
      %p129 = scmp.eq.s32.totalorder %s21, 1
      %p130 = scmp.ne.s32.totalorder %s125, %s127
      %p131 = scmp.eq.s32.totalorder %s21, 0
      %p132 = por %p130, %p131
      %p133 = scmp.ne.s32.totalorder %s125, %s127
      %p134 = scmp.eq.s32.totalorder %s26, 1
      %p135 = por %p133, %p134
      %p136 = scmp.ne.s32.totalorder %s127, %s128
      %p137 = scmp.eq.s32.totalorder %s26, 0
      %p138 = por %p136, %p137
      %p139 = scmp.ne.s32.totalorder %s127, %s128
      %p140 = scmp.eq.s32.totalorder %s27, 1
      %p141 = por %p139, %p140
      %p143 = scmp.ne.s32.totalorder %s128, %s142
      %p144 = scmp.eq.s32.totalorder %s27, 0
      %p145 = por %p143, %p144
      %s147 = sadd.s32 %s146, 1
      %p150 = scmp.eq.s32.totalorder %s21, 1
      %p151 = scmp.ne.s32.totalorder %s146, %s148
      %p152 = scmp.eq.s32.totalorder %s21, 0
      %p153 = por %p151, %p152
      %p154 = scmp.ne.s32.totalorder %s146, %s148
      %p155 = scmp.eq.s32.totalorder %s26, 1
      %p156 = por %p154, %p155
      %p157 = scmp.ne.s32.totalorder %s148, %s149
      %p158 = scmp.eq.s32.totalorder %s26, 0
      %p159 = por %p157, %p158
      %p160 = scmp.ne.s32.totalorder %s148, %s149
      %p161 = scmp.eq.s32.totalorder %s27, 1
      %p162 = por %p160, %p161
      %p164 = scmp.ne.s32.totalorder %s149, %s163
      %p165 = scmp.eq.s32.totalorder %s27, 0
      %p166 = por %p164, %p165
      %s168 = sadd.s32 %s167, 1
      %p171 = scmp.eq.s32.totalorder %s21, 1
      %p172 = scmp.ne.s32.totalorder %s167, %s169
      %p173 = scmp.eq.s32.totalorder %s21, 0
      %p174 = por %p172, %p173
      %p175 = scmp.ne.s32.totalorder %s167, %s169
      %p176 = scmp.eq.s32.totalorder %s26, 1
      %p177 = por %p175, %p176
      %p178 = scmp.ne.s32.totalorder %s169, %s170
      %p179 = scmp.eq.s32.totalorder %s26, 0
      %p180 = por %p178, %p179
      %p181 = scmp.ne.s32.totalorder %s169, %s170
      %p182 = scmp.eq.s32.totalorder %s27, 1
      %p183 = por %p181, %p182
      %p185 = scmp.ne.s32.totalorder %s170, %s184
      %p186 = scmp.eq.s32.totalorder %s27, 0
      %p187 = por %p185, %p186
      %s189 = sadd.s32 %s188, 1
      %p192 = scmp.eq.s32.totalorder %s21, 1
      %p193 = scmp.ne.s32.totalorder %s188, %s190
      %p194 = scmp.eq.s32.totalorder %s21, 0
      %p195 = por %p193, %p194
      %p196 = scmp.ne.s32.totalorder %s188, %s190
      %p197 = scmp.eq.s32.totalorder %s26, 1
      %p198 = por %p196, %p197
      %p199 = scmp.ne.s32.totalorder %s190, %s191
      %p200 = scmp.eq.s32.totalorder %s26, 0
      %p201 = por %p199, %p200
      %p202 = scmp.ne.s32.totalorder %s190, %s191
      %p203 = scmp.eq.s32.totalorder %s27, 1
      %p204 = por %p202, %p203
      %p206 = scmp.ne.s32.totalorder %s191, %s205
      %p207 = scmp.eq.s32.totalorder %s27, 0
      %p208 = por %p206, %p207
      %s209 = ssub.s32 %s28, %s40
      %p210 = scmp.eq.s32.totalorder %s209, 0
      %s212 = sadd.s32 %s211, 1
      %s213 = scalar_select %p210, %s211, %s212
      %p216 = pneg %p210
      %p217 = scmp.eq.s32.totalorder %s21, 1
      %p218 = por %p216, %p217
      %p219 = scmp.ne.s32.totalorder %s211, %s214
      %p220 = scmp.eq.s32.totalorder %s21, 0
      %p221 = por %p219, %p220
      %p222 = scmp.ne.s32.totalorder %s211, %s214
      %p223 = scmp.eq.s32.totalorder %s26, 1
      %p224 = por %p222, %p223
      %p225 = scmp.ne.s32.totalorder %s214, %s215
      %p226 = scmp.eq.s32.totalorder %s26, 0
      %p227 = por %p225, %p226
      %p228 = scmp.ne.s32.totalorder %s214, %s215
      %p229 = scmp.eq.s32.totalorder %s27, 1
      %p230 = por %p228, %p229
      %p232 = scmp.ne.s32.totalorder %s215, %s231
      %p233 = scmp.eq.s32.totalorder %s27, 0
      %p234 = por %p232, %p233
      %p235 = scmp.le.s32.totalorder 1, %s21
      %p236 = scmp.lt.s32.totalorder %s21, 3
      %p237 = pnand %p235, %p236
      %p238 = pneg %p237
      // Predicated region
      $region9: #{tpu_custom_call.1} parent=5 // pred_check
        _
      $region10: #{tpu_custom_call.1} parent=5 // pred_check_branch
        %240 = sbr.rel (%p237) target = $region12
      $region11: #{tpu_custom_call.1} parent=5 // pred_region
        %s241 = ssub.s32 %s21, 1
        // Predicated region
        $region13: #{tpu_custom_call.1} parent=11 // pred_check
          %p242 = pneg %p59
        $region14: #{tpu_custom_call.1} parent=11 // pred_check_branch
          %244 = sbr.rel (%p242) target = $region16
        $region15: #{tpu_custom_call.1} parent=11 // pred_region
          %p245 = scmp.lt.s32.totalorder %s30, 0
          %s246 = scalar_select %p245, %s30, 0
          %s247 = smul.addr %s246, 8
          %s248 = scalar_lea.vmem %s0, %s247
        $region16: #{tpu_custom_call.1} parent=11 // pred_fallthru
          _
        // Predicated region
        $region17: #{tpu_custom_call.1} parent=11 // pred_check
          %p249 = pneg %p138
        $region18: #{tpu_custom_call.1} parent=11 // pred_check_branch
          %251 = sbr.rel (%p249) target = $region20
        $region19: #{tpu_custom_call.1} parent=11 // pred_region
          %s253 = ssub.s32 512, 512
          %254 = vsyncadd [#allocation7], %s253
          %s255 = sshll.u32 [#allocation8], 4
          %s256 = int_to_ptr.vmem [resolvable:$true] %s255
          %261 = dma.hbm_to_vmem [thread:$0]  %s3, 512, %s256, [#allocation7], 128, 128, 8
        $region20: #{tpu_custom_call.1} parent=11 // pred_fallthru
          _
        // Predicated region
        $region21: #{tpu_custom_call.1} parent=11 // pred_check
          %p262 = pneg %p159
        $region22: #{tpu_custom_call.1} parent=11 // pred_check_branch
          %264 = sbr.rel (%p262) target = $region24
        $region23: #{tpu_custom_call.1} parent=11 // pred_region
          %s266 = ssub.s32 512, 512
          %267 = vsyncadd [#allocation10], %s266
          %s268 = sshll.u32 [#allocation9], 4
          %s269 = int_to_ptr.vmem [resolvable:$true] %s268
          %274 = dma.hbm_to_vmem [thread:$0]  %s4, 512, %s269, [#allocation10], 128, 128, 8
        $region24: #{tpu_custom_call.1} parent=11 // pred_fallthru
          _
        // Predicated region
        $region25: #{tpu_custom_call.1} parent=11 // pred_check
          %p275 = pneg %p180
        $region26: #{tpu_custom_call.1} parent=11 // pred_check_branch
          %277 = sbr.rel (%p275) target = $region28
        $region27: #{tpu_custom_call.1} parent=11 // pred_region
          _
        $region28: #{tpu_custom_call.1} parent=11 // pred_fallthru
          _
        // Predicated region
        $region29: #{tpu_custom_call.1} parent=11 // pred_check
          %p278 = pneg %p201
        $region30: #{tpu_custom_call.1} parent=11 // pred_check_branch
          %280 = sbr.rel (%p278) target = $region32
        $region31: #{tpu_custom_call.1} parent=11 // pred_region
          _
        $region32: #{tpu_custom_call.1} parent=11 // pred_fallthru
          _
      $region12: #{tpu_custom_call.1} parent=5 // pred_fallthru
        _
      %p281 = scmp.lt.s32.totalorder %s21, 2
      // Predicated region
      $region33: #{tpu_custom_call.1} parent=5 // pred_check
        %p282 = pneg %p281
      $region34: #{tpu_custom_call.1} parent=5 // pred_check_branch
        %284 = sbr.rel (%p282) target = $region36
      $region35: #{tpu_custom_call.1} parent=5 // pred_region
        // Predicated region
        $region37: #{tpu_custom_call.1} parent=35 // pred_check
          %p285 = pneg %p81
        $region38: #{tpu_custom_call.1} parent=35 // pred_check_branch
          %287 = sbr.rel (%p285) target = $region40
        $region39: #{tpu_custom_call.1} parent=35 // pred_region
          %s288 = sand.u32 %s71, 1
          %s289 = scalar_lea.sflag [#allocation4], %s288
          %s290 = sand.u32 %s71, 1
          %s291 = smul.addr %s290, 32
          %s292 = scalar_lea.vmem [#allocation3], %s291
          %s293 = smul.u32 4, %s29
          %s295 = ssub.s32 512, 512
          %296 = vsyncadd %s289, %s295
          %s297 = sadd.s32 %s28, %s293
          %s298 = smul.addr %s297, 128
          %s299 = scalar_lea.hbm %s1, %s298
          %s300 = sshll.u32 %s292, 4
          %s301 = int_to_ptr.vmem [resolvable:$true] %s300
          %306 = dma.hbm_to_vmem [thread:$0]  %s299, 512, %s301, %s289, 128, 128, 8
        $region40: #{tpu_custom_call.1} parent=35 // pred_fallthru
          _
        // Predicated region
        $region41: #{tpu_custom_call.1} parent=35 // pred_check
          %p307 = pneg %p111
        $region42: #{tpu_custom_call.1} parent=35 // pred_check_branch
          %309 = sbr.rel (%p307) target = $region44
        $region43: #{tpu_custom_call.1} parent=35 // pred_region
          %s310 = sand.u32 %s21, 1
          %s311 = scalar_lea.sflag [#allocation7], %s310
          %s312 = sand.u32 %s101, 1
          %s313 = smul.addr %s312, 32
          %s314 = scalar_lea.vmem [#allocation6], %s313
          %s315 = ssub.s32 1, %s29
          %s316 = smul.u32 4, %s315
          %s318 = ssub.s32 512, 512
          %319 = vsyncadd %s311, %s318
          %s320 = sadd.s32 %s28, %s316
          %s321 = smul.addr %s320, 128
          %s322 = scalar_lea.hbm %s2, %s321
          %s323 = sshll.u32 %s314, 4
          %s324 = int_to_ptr.vmem [resolvable:$true] %s323
          %329 = dma.hbm_to_vmem [thread:$0]  %s322, 512, %s324, %s311, 128, 128, 8
        $region44: #{tpu_custom_call.1} parent=35 // pred_fallthru
          _
      $region36: #{tpu_custom_call.1} parent=5 // pred_fallthru
        _
      %p330 = scmp.le.s32.totalorder 1, %s21
      %p331 = scmp.lt.s32.totalorder %s21, 3
      %p332 = pnand %p330, %p331
      %p333 = pneg %p332
      // Predicated region
      $region45: #{tpu_custom_call.1} parent=5 // pred_check
        _
      $region46: #{tpu_custom_call.1} parent=5 // pred_check_branch
        %335 = sbr.rel (%p332) target = $region48
      $region47: #{tpu_custom_call.1} parent=5 // pred_region
        %s336 = ssub.s32 %s21, 1
        %s337 = sand.u32 %s74, 1
        %s338 = scalar_lea.sflag [#allocation4], %s337
        %s339 = sand.u32 %s74, 1
        %s340 = smul.addr %s339, 32
        %s341 = scalar_lea.vmem [#allocation3], %s340
        // Predicated region
        $region49: #{tpu_custom_call.1} parent=47 // pred_check
          %p342 = pneg %p87
        $region50: #{tpu_custom_call.1} parent=47 // pred_check_branch
          %344 = sbr.rel (%p342) target = $region52
        $region51: #{tpu_custom_call.1} parent=47 // pred_region
          %345 = dma.done %s338, 512
        $region52: #{tpu_custom_call.1} parent=47 // pred_fallthru
          _
        %s346 = sand.u32 %s26, 1
        %s347 = scalar_lea.sflag [#allocation7], %s346
        %s348 = sand.u32 %s104, 1
        %s349 = smul.addr %s348, 32
        %s350 = scalar_lea.vmem [#allocation6], %s349
        // Predicated region
        $region53: #{tpu_custom_call.1} parent=47 // pred_check
          %p351 = pneg %p117
        $region54: #{tpu_custom_call.1} parent=47 // pred_check_branch
          %353 = sbr.rel (%p351) target = $region56
        $region55: #{tpu_custom_call.1} parent=47 // pred_region
          %354 = dma.done %s347, 512
        $region56: #{tpu_custom_call.1} parent=47 // pred_fallthru
          _
        // Predicated region
        $region57: #{tpu_custom_call.1} parent=47 // pred_check
          %p355 = pneg %p138
        $region58: #{tpu_custom_call.1} parent=47 // pred_check_branch
          %357 = sbr.rel (%p355) target = $region60
        $region59: #{tpu_custom_call.1} parent=47 // pred_region
          %358 = dma.done [#allocation7], 512
        $region60: #{tpu_custom_call.1} parent=47 // pred_fallthru
          _
        // Predicated region
        $region61: #{tpu_custom_call.1} parent=47 // pred_check
          %p359 = pneg %p159
        $region62: #{tpu_custom_call.1} parent=47 // pred_check_branch
          %361 = sbr.rel (%p359) target = $region64
        $region63: #{tpu_custom_call.1} parent=47 // pred_region
          %362 = dma.done [#allocation10], 512
        $region64: #{tpu_custom_call.1} parent=47 // pred_fallthru
          _
        %p363 = scmp.lt.s32.totalorder %s30, 0
        %s364 = scalar_select %p363, %s30, 0
        %s365 = smul.addr %s364, 8
        %s366 = scalar_lea.vmem %s0, %s365
        %p367 = pneg %p59
        %p368 = pneg %p56
        %s369 = sand.u32 %s74, 1
        %s370 = scalar_lea.sflag [#allocation4], %s369
        %s371 = sand.u32 %s74, 1
        %s372 = smul.addr %s371, 32
        %s373 = scalar_lea.vmem [#allocation3], %s372
        %p374 = pneg %p87
        %p375 = pneg %p84
        %s376 = sand.u32 %s26, 1
        %s377 = scalar_lea.sflag [#allocation7], %s376
        %s378 = sand.u32 %s104, 1
        %s379 = smul.addr %s378, 32
        %s380 = scalar_lea.vmem [#allocation6], %s379
        %p381 = pneg %p117
        %p382 = pneg %p114
        %p383 = pneg %p138
        %p384 = pneg %p135
        %p385 = pneg %p159
        %p386 = pneg %p156
        %p387 = pneg %p180
        %p388 = pneg %p177
        %p389 = pneg %p201
        %p390 = pneg %p198
        %p391 = pneg %p227
        %p392 = pneg %p224
        %p393 = scmp.lt.s32.totalorder %s30, 0
        %s394 = scalar_select %p393, %s30, 0
        %s395 = smul.addr %s394, 8
        %s396 = scalar_lea.vmem %s0, %s395
        %s397 = smul.u32 4, %s31
        %s398 = ssub.s32 1, %s31
        %s399 = smul.u32 4, %s398
        %p400 = scmp.eq.s32.totalorder %s31, 0
        // Predicated region
        $region65: #{tpu_custom_call.1} parent=47 // pred_check
          %p401 = pneg %p400
        $region66: #{tpu_custom_call.1} parent=47 // pred_check_branch
          %403 = sbr.rel (%p401) target = $region68
        $region67: #{tpu_custom_call.1} parent=47 // pred_region
          %vm404 = vcmask 523264
          %405 = vst.msk [vmem:[#allocation2] sm:$0xff] %vm404, 0.0
        $region68: #{tpu_custom_call.1} parent=47 // pred_fallthru
          _
        %v406 = vld [vmem:[%s396] sm:$0xff]
        %407 = vset.pattern.permute.xlu0 0
        %408 = vperm.xlu0 %407, %v406
        %v409 = vpop.permute.xlu0 %408
        %v410 = vld [vmem:[#allocation8] sm:$0xff]
        %v411 = vld [vmem:[#allocation8 + $0x8] sm:$0xff]
        %v412 = vld [vmem:[#allocation8 + $0x10] sm:$0xff]
        %v413 = vld [vmem:[#allocation8 + $0x18] sm:$0xff]
        %v414 = vld [vmem:[#allocation9] sm:$0xff]
        %v415 = vld [vmem:[#allocation9 + $0x8] sm:$0xff]
        %v416 = vld [vmem:[#allocation9 + $0x10] sm:$0xff]
        %v417 = vld [vmem:[#allocation9 + $0x18] sm:$0xff]
        %v418 = vld [vmem:[%s5] sm:$0x1]
        %v420 = vlaneseq
        %v421 = vshrl.u32 %v420, 7
        %v422 = vsub.s32 0, %v421
        %v423 = vrot.slane %v418, %v422
        %v424 = vld [vmem:[%s6] sm:$0x1]
        %v426 = vlaneseq
        %v427 = vshrl.u32 %v426, 7
        %v428 = vsub.s32 0, %v427
        %v429 = vrot.slane %v424, %v428
        %s430 = smul.u32 %s31, 4
        %s431 = ssub.s32 1, %s31
        %s432 = smul.u32 %s431, 4
        %v433 = vld [vmem:[#allocation2] sm:$0xff]
        %v434 = vld [vmem:[%s341] sm:$0xff]
        %vm435 = vcmask 261120
        %v437 = vsel %vm435, %v433, 0
        %439 = vmatprep.subr.mxu0 0.0
        %440 = vmatpush1.msra.mxu0 %v410
        %441 = vmatprep.subr.mxu0 0.0
        %442 = vmatpush1.msra.mxu0 %v411
        %443 = vmatprep.subr.mxu0 0.0
        %444 = vmatpush1.msra.mxu0 %v412
        %445 = vmatprep.subr.mxu0 0.0
        %446 = vmatpush1.msra.mxu0 %v413
        %447 = vmatprep.subr.mxu0 0.0
        %448 = vmatpush1.msra.mxu0 0.0
        %449 = vmatprep.subr.mxu0 0.0
        %450 = vmatpush1.msra.mxu0 0.0
        %451 = vmatprep.subr.mxu0 0.0
        %452 = vmatpush1.msra.mxu0 0.0
        %453 = vmatprep.subr.mxu0 0.0
        %454 = vmatpush1.msra.mxu0 0.0
        %455 = vmatprep.subr.mxu0 0.0
        %456 = vmatpush1.msra.mxu0 0.0
        %457 = vmatprep.subr.mxu0 0.0
        %458 = vmatpush1.msra.mxu0 0.0
        %459 = vmatprep.subr.mxu0 0.0
        %460 = vmatpush1.msra.mxu0 0.0
        %461 = vmatprep.subr.mxu0 0.0
        %462 = vmatpush1.msra.mxu0 0.0
        %463 = vmatprep.subr.mxu0 0.0
        %464 = vmatpush1.msra.mxu0 0.0
        %465 = vmatprep.subr.mxu0 0.0
        %466 = vmatpush1.msra.mxu0 0.0
        %467 = vmatprep.subr.mxu0 0.0
        %468 = vmatpush1.msra.mxu0 0.0
        %469 = vmatprep.subr.mxu0 0.0
        %470 = vmatpush1.msra.mxu0 0.0
        %471 = vmatprep.subr.mxu0 0.0
        %472 = vmatpush1.msra.mxu0 0.0
        %473 = vmatprep.subr.mxu0 0.0
        %474 = vmatpush1.msra.mxu0 0.0
        %475 = vmatprep.subr.mxu0 0.0
        %476 = vmatpush1.msra.mxu0 0.0
        %477 = vmatprep.subr.mxu0 0.0
        %478 = vmatpush1.msra.mxu0 0.0
        %479 = vmatprep.subr.mxu0 0.0
        %480 = vmatpush1.msra.mxu0 0.0
        %481 = vmatprep.subr.mxu0 0.0
        %482 = vmatpush1.msra.mxu0 0.0
        %483 = vmatprep.subr.mxu0 0.0
        %484 = vmatpush1.msra.mxu0 0.0
        %485 = vmatprep.subr.mxu0 0.0
        %486 = vmatpush1.msra.mxu0 0.0
        %487 = vmatprep.subr.mxu0 0.0
        %488 = vmatpush1.msra.mxu0 0.0
        %489 = vmatprep.subr.mxu0 0.0
        %490 = vmatpush1.msra.mxu0 0.0
        %491 = vmatprep.subr.mxu0 0.0
        %492 = vmatpush1.msra.mxu0 0.0
        %493 = vmatprep.subr.mxu0 0.0
        %494 = vmatpush1.msra.mxu0 0.0
        %495 = vmatprep.subr.mxu0 0.0
        %496 = vmatpush1.msra.mxu0 0.0
        %497 = vmatprep.subr.mxu0 0.0
        %498 = vmatpush1.msra.mxu0 0.0
        %499 = vmatprep.subr.mxu0 0.0
        %500 = vmatpush1.msra.mxu0 0.0
        %501 = vmatprep.subr.mxu0 0.0
        %502 = vmatpush1.msra.mxu0 0.0
        %503 = vmatprep.mubr.f32.mxu0 0.0
        %504 = vmatmul.mubr.f32.gmra.mrb[0].mxu0 %v437
        %v505 = vpop.f32.mrb[0].mxu0
        %v506 = vadd.f32 0.0, %v505
        %v507 = vpop.f32.mrb[0].mxu0
        %508 = vdwg.mxu0
        %v509 = vadd.f32 %v434, %v506
        %v510 = vxor.u32 %v509, 2147483648
        %v511 = vmul.f32 %v510, 1.442695
        %v512 = vpow.pop %v511
        %v513 = vadd.f32 %v512, 1.0
        %v514 = vrcp.pop %v513
        %v515 = vmul.f32 1.0, %v514
        %516 = vrot.lane.b32.xlu0 %v423, 64
        %v517 = vpop.permute.xlu0 %516
        %v519 = vadd.f32 %v506, %v517
        %521 = vrot.lane.b32.xlu0 %v519, 64
        %v522 = vpop.permute.xlu0 %521
        %v524 = vmul.f32 %v515, %v522
        %526 = vrot.lane.b32.xlu0 %v524, 64
        %v527 = vpop.permute.xlu0 %526
        %v529 = vadd.f32 %v434, %v527
        %v530 = vtanh.pop %v529
        %v531 = vsub.f32 1.0, %v515
        %533 = vrot.lane.b32.xlu0 %v530, 96
        %v534 = vpop.permute.xlu0 %533
        %v536 = vmul.f32 %v531, %v534
        %537 = vrot.lane.b32.xlu0 %v433, 32
        %v538 = vpop.permute.xlu0 %537
        %v540 = vmul.f32 %v515, %v538
        %v541 = vadd.f32 %v536, %v540
        %v542 = vstv %s430
        %vm543 = vcmp.gt.s32.totalorder %v409, %v542
        %v544 = vsel %vm543, %v541, %v538
        %s545 = sadd.s32 %s432, 3
        %s546 = scalar_lea.vmem %s350, 24 [#allocation6]
        %v547 = vld [vmem:[%s546] sm:$0xff]
        %548 = vrot.lane.b32.xlu0 %v433, 96
        %v549 = vpop.permute.xlu0 %548
        %v550 = vsel %vm435, %v549, 0
        %552 = vmatprep.subr.mxu0 0.0
        %553 = vmatpush1.msra.mxu0 %v414
        %554 = vmatprep.subr.mxu0 0.0
        %555 = vmatpush1.msra.mxu0 %v415
        %556 = vmatprep.subr.mxu0 0.0
        %557 = vmatpush1.msra.mxu0 %v416
        %558 = vmatprep.subr.mxu0 0.0
        %559 = vmatpush1.msra.mxu0 %v417
        %560 = vmatprep.subr.mxu0 0.0
        %561 = vmatpush1.msra.mxu0 0.0
        %562 = vmatprep.subr.mxu0 0.0
        %563 = vmatpush1.msra.mxu0 0.0
        %564 = vmatprep.subr.mxu0 0.0
        %565 = vmatpush1.msra.mxu0 0.0
        %566 = vmatprep.subr.mxu0 0.0
        %567 = vmatpush1.msra.mxu0 0.0
        %568 = vmatprep.subr.mxu0 0.0
        %569 = vmatpush1.msra.mxu0 0.0
        %570 = vmatprep.subr.mxu0 0.0
        %571 = vmatpush1.msra.mxu0 0.0
        %572 = vmatprep.subr.mxu0 0.0
        %573 = vmatpush1.msra.mxu0 0.0
        %574 = vmatprep.subr.mxu0 0.0
        %575 = vmatpush1.msra.mxu0 0.0
        %576 = vmatprep.subr.mxu0 0.0
        %577 = vmatpush1.msra.mxu0 0.0
        %578 = vmatprep.subr.mxu0 0.0
        %579 = vmatpush1.msra.mxu0 0.0
        %580 = vmatprep.subr.mxu0 0.0
        %581 = vmatpush1.msra.mxu0 0.0
        %582 = vmatprep.subr.mxu0 0.0
        %583 = vmatpush1.msra.mxu0 0.0
        %584 = vmatprep.subr.mxu0 0.0
        %585 = vmatpush1.msra.mxu0 0.0
        %586 = vmatprep.subr.mxu0 0.0
        %587 = vmatpush1.msra.mxu0 0.0
        %588 = vmatprep.subr.mxu0 0.0
        %589 = vmatpush1.msra.mxu0 0.0
        %590 = vmatprep.subr.mxu0 0.0
        %591 = vmatpush1.msra.mxu0 0.0
        %592 = vmatprep.subr.mxu0 0.0
        %593 = vmatpush1.msra.mxu0 0.0
        %594 = vmatprep.subr.mxu0 0.0
        %595 = vmatpush1.msra.mxu0 0.0
        %596 = vmatprep.subr.mxu0 0.0
        %597 = vmatpush1.msra.mxu0 0.0
        %598 = vmatprep.subr.mxu0 0.0
        %599 = vmatpush1.msra.mxu0 0.0
        %600 = vmatprep.subr.mxu0 0.0
        %601 = vmatpush1.msra.mxu0 0.0
        %602 = vmatprep.subr.mxu0 0.0
        %603 = vmatpush1.msra.mxu0 0.0
        %604 = vmatprep.subr.mxu0 0.0
        %605 = vmatpush1.msra.mxu0 0.0
        %606 = vmatprep.subr.mxu0 0.0
        %607 = vmatpush1.msra.mxu0 0.0
        %608 = vmatprep.subr.mxu0 0.0
        %609 = vmatpush1.msra.mxu0 0.0
        %610 = vmatprep.subr.mxu0 0.0
        %611 = vmatpush1.msra.mxu0 0.0
        %612 = vmatprep.subr.mxu0 0.0
        %613 = vmatpush1.msra.mxu0 0.0
        %614 = vmatprep.subr.mxu0 0.0
        %615 = vmatpush1.msra.mxu0 0.0
        %616 = vmatprep.mubr.f32.mxu0 0.0
        %617 = vmatmul.mubr.f32.gmra.mrb[0].mxu0 %v550
        %v618 = vpop.f32.mrb[0].mxu0
        %v619 = vadd.f32 0.0, %v618
        %v620 = vpop.f32.mrb[0].mxu0
        %621 = vdwg.mxu0
        %v622 = vadd.f32 %v547, %v619
        %v623 = vxor.u32 %v622, 2147483648
        %v624 = vmul.f32 %v623, 1.442695
        %v625 = vpow.pop %v624
        %v626 = vadd.f32 %v625, 1.0
        %v627 = vrcp.pop %v626
        %v628 = vmul.f32 1.0, %v627
        %629 = vrot.lane.b32.xlu0 %v429, 64
        %v630 = vpop.permute.xlu0 %629
        %v632 = vadd.f32 %v619, %v630
        %634 = vrot.lane.b32.xlu0 %v632, 64
        %v635 = vpop.permute.xlu0 %634
        %v637 = vmul.f32 %v628, %v635
        %639 = vrot.lane.b32.xlu0 %v637, 64
        %v640 = vpop.permute.xlu0 %639
        %v642 = vadd.f32 %v547, %v640
        %v643 = vtanh.pop %v642
        %v644 = vsub.f32 1.0, %v628
        %646 = vrot.lane.b32.xlu0 %v643, 96
        %v647 = vpop.permute.xlu0 %646
        %v649 = vmul.f32 %v644, %v647
        %v650 = vmul.f32 %v628, %v433
        %v651 = vadd.f32 %v649, %v650
        %v652 = vstv %s545
        %vm653 = vcmp.gt.s32.totalorder %v409, %v652
        %v654 = vsel %vm653, %v651, %v433
        %s655 = sadd.s32 %s430, 1
        %s656 = scalar_lea.vmem %s341, 8 [#allocation3]
        %v657 = vld [vmem:[%s656] sm:$0xff]
        %659 = vrot.lane.b32.xlu0 %v544, 96
        %v660 = vpop.permute.xlu0 %659
        %v661 = vsel %vm435, %v660, 0
        %663 = vmatprep.subr.mxu0 0.0
        %664 = vmatpush1.msra.mxu0 %v410
        %665 = vmatprep.subr.mxu0 0.0
        %666 = vmatpush1.msra.mxu0 %v411
        %667 = vmatprep.subr.mxu0 0.0
        %668 = vmatpush1.msra.mxu0 %v412
        %669 = vmatprep.subr.mxu0 0.0
        %670 = vmatpush1.msra.mxu0 %v413
        %671 = vmatprep.subr.mxu0 0.0
        %672 = vmatpush1.msra.mxu0 0.0
        %673 = vmatprep.subr.mxu0 0.0
        %674 = vmatpush1.msra.mxu0 0.0
        %675 = vmatprep.subr.mxu0 0.0
        %676 = vmatpush1.msra.mxu0 0.0
        %677 = vmatprep.subr.mxu0 0.0
        %678 = vmatpush1.msra.mxu0 0.0
        %679 = vmatprep.subr.mxu0 0.0
        %680 = vmatpush1.msra.mxu0 0.0
        %681 = vmatprep.subr.mxu0 0.0
        %682 = vmatpush1.msra.mxu0 0.0
        %683 = vmatprep.subr.mxu0 0.0
        %684 = vmatpush1.msra.mxu0 0.0
        %685 = vmatprep.subr.mxu0 0.0
        %686 = vmatpush1.msra.mxu0 0.0
        %687 = vmatprep.subr.mxu0 0.0
        %688 = vmatpush1.msra.mxu0 0.0
        %689 = vmatprep.subr.mxu0 0.0
        %690 = vmatpush1.msra.mxu0 0.0
        %691 = vmatprep.subr.mxu0 0.0
        %692 = vmatpush1.msra.mxu0 0.0
        %693 = vmatprep.subr.mxu0 0.0
        %694 = vmatpush1.msra.mxu0 0.0
        %695 = vmatprep.subr.mxu0 0.0
        %696 = vmatpush1.msra.mxu0 0.0
        %697 = vmatprep.subr.mxu0 0.0
        %698 = vmatpush1.msra.mxu0 0.0
        %699 = vmatprep.subr.mxu0 0.0
        %700 = vmatpush1.msra.mxu0 0.0
        %701 = vmatprep.subr.mxu0 0.0
        %702 = vmatpush1.msra.mxu0 0.0
        %703 = vmatprep.subr.mxu0 0.0
        %704 = vmatpush1.msra.mxu0 0.0
        %705 = vmatprep.subr.mxu0 0.0
        %706 = vmatpush1.msra.mxu0 0.0
        %707 = vmatprep.subr.mxu0 0.0
        %708 = vmatpush1.msra.mxu0 0.0
        %709 = vmatprep.subr.mxu0 0.0
        %710 = vmatpush1.msra.mxu0 0.0
        %711 = vmatprep.subr.mxu0 0.0
        %712 = vmatpush1.msra.mxu0 0.0
        %713 = vmatprep.subr.mxu0 0.0
        %714 = vmatpush1.msra.mxu0 0.0
        %715 = vmatprep.subr.mxu0 0.0
        %716 = vmatpush1.msra.mxu0 0.0
        %717 = vmatprep.subr.mxu0 0.0
        %718 = vmatpush1.msra.mxu0 0.0
        %719 = vmatprep.subr.mxu0 0.0
        %720 = vmatpush1.msra.mxu0 0.0
        %721 = vmatprep.subr.mxu0 0.0
        %722 = vmatpush1.msra.mxu0 0.0
        %723 = vmatprep.subr.mxu0 0.0
        %724 = vmatpush1.msra.mxu0 0.0
        %725 = vmatprep.subr.mxu0 0.0
        %726 = vmatpush1.msra.mxu0 0.0
        %727 = vmatprep.mubr.f32.mxu0 0.0
        %728 = vmatmul.mubr.f32.gmra.mrb[0].mxu0 %v661
        %v729 = vpop.f32.mrb[0].mxu0
        %v730 = vadd.f32 0.0, %v729
        %v731 = vpop.f32.mrb[0].mxu0
        %732 = vdwg.mxu0
        %v733 = vadd.f32 %v657, %v730
        %v734 = vxor.u32 %v733, 2147483648
        %v735 = vmul.f32 %v734, 1.442695
        %v736 = vpow.pop %v735
        %v737 = vadd.f32 %v736, 1.0
        %v738 = vrcp.pop %v737
        %v739 = vmul.f32 1.0, %v738
        %v740 = vadd.f32 %v730, %v517
        %742 = vrot.lane.b32.xlu0 %v740, 64
        %v743 = vpop.permute.xlu0 %742
        %v745 = vmul.f32 %v739, %v743
        %747 = vrot.lane.b32.xlu0 %v745, 64
        %v748 = vpop.permute.xlu0 %747
        %v750 = vadd.f32 %v657, %v748
        %v751 = vtanh.pop %v750
        %v752 = vsub.f32 1.0, %v739
        %754 = vrot.lane.b32.xlu0 %v751, 96
        %v755 = vpop.permute.xlu0 %754
        %v757 = vmul.f32 %v752, %v755
        %v758 = vmul.f32 %v739, %v544
        %v759 = vadd.f32 %v757, %v758
        %v760 = vstv %s655
        %vm761 = vcmp.gt.s32.totalorder %v409, %v760
        %v762 = vsel %vm761, %v759, %v544
        %s763 = sadd.s32 %s432, 2
        %s764 = scalar_lea.vmem %s350, 16 [#allocation6]
        %v765 = vld [vmem:[%s764] sm:$0xff]
        %767 = vrot.lane.b32.xlu0 %v654, 96
        %v768 = vpop.permute.xlu0 %767
        %v769 = vsel %vm435, %v768, 0
        %771 = vmatprep.subr.mxu0 0.0
        %772 = vmatpush1.msra.mxu0 %v414
        %773 = vmatprep.subr.mxu0 0.0
        %774 = vmatpush1.msra.mxu0 %v415
        %775 = vmatprep.subr.mxu0 0.0
        %776 = vmatpush1.msra.mxu0 %v416
        %777 = vmatprep.subr.mxu0 0.0
        %778 = vmatpush1.msra.mxu0 %v417
        %779 = vmatprep.subr.mxu0 0.0
        %780 = vmatpush1.msra.mxu0 0.0
        %781 = vmatprep.subr.mxu0 0.0
        %782 = vmatpush1.msra.mxu0 0.0
        %783 = vmatprep.subr.mxu0 0.0
        %784 = vmatpush1.msra.mxu0 0.0
        %785 = vmatprep.subr.mxu0 0.0
        %786 = vmatpush1.msra.mxu0 0.0
        %787 = vmatprep.subr.mxu0 0.0
        %788 = vmatpush1.msra.mxu0 0.0
        %789 = vmatprep.subr.mxu0 0.0
        %790 = vmatpush1.msra.mxu0 0.0
        %791 = vmatprep.subr.mxu0 0.0
        %792 = vmatpush1.msra.mxu0 0.0
        %793 = vmatprep.subr.mxu0 0.0
        %794 = vmatpush1.msra.mxu0 0.0
        %795 = vmatprep.subr.mxu0 0.0
        %796 = vmatpush1.msra.mxu0 0.0
        %797 = vmatprep.subr.mxu0 0.0
        %798 = vmatpush1.msra.mxu0 0.0
        %799 = vmatprep.subr.mxu0 0.0
        %800 = vmatpush1.msra.mxu0 0.0
        %801 = vmatprep.subr.mxu0 0.0
        %802 = vmatpush1.msra.mxu0 0.0
        %803 = vmatprep.subr.mxu0 0.0
        %804 = vmatpush1.msra.mxu0 0.0
        %805 = vmatprep.subr.mxu0 0.0
        %806 = vmatpush1.msra.mxu0 0.0
        %807 = vmatprep.subr.mxu0 0.0
        %808 = vmatpush1.msra.mxu0 0.0
        %809 = vmatprep.subr.mxu0 0.0
        %810 = vmatpush1.msra.mxu0 0.0
        %811 = vmatprep.subr.mxu0 0.0
        %812 = vmatpush1.msra.mxu0 0.0
        %813 = vmatprep.subr.mxu0 0.0
        %814 = vmatpush1.msra.mxu0 0.0
        %815 = vmatprep.subr.mxu0 0.0
        %816 = vmatpush1.msra.mxu0 0.0
        %817 = vmatprep.subr.mxu0 0.0
        %818 = vmatpush1.msra.mxu0 0.0
        %819 = vmatprep.subr.mxu0 0.0
        %820 = vmatpush1.msra.mxu0 0.0
        %821 = vmatprep.subr.mxu0 0.0
        %822 = vmatpush1.msra.mxu0 0.0
        %823 = vmatprep.subr.mxu0 0.0
        %824 = vmatpush1.msra.mxu0 0.0
        %825 = vmatprep.subr.mxu0 0.0
        %826 = vmatpush1.msra.mxu0 0.0
        %827 = vmatprep.subr.mxu0 0.0
        %828 = vmatpush1.msra.mxu0 0.0
        %829 = vmatprep.subr.mxu0 0.0
        %830 = vmatpush1.msra.mxu0 0.0
        %831 = vmatprep.subr.mxu0 0.0
        %832 = vmatpush1.msra.mxu0 0.0
        %833 = vmatprep.subr.mxu0 0.0
        %834 = vmatpush1.msra.mxu0 0.0
        %835 = vmatprep.mubr.f32.mxu0 0.0
        %836 = vmatmul.mubr.f32.gmra.mrb[0].mxu0 %v769
        %v837 = vpop.f32.mrb[0].mxu0
        %v838 = vadd.f32 0.0, %v837
        %v839 = vpop.f32.mrb[0].mxu0
        %840 = vdwg.mxu0
        %v841 = vadd.f32 %v765, %v838
        %v842 = vxor.u32 %v841, 2147483648
        %v843 = vmul.f32 %v842, 1.442695
        %v844 = vpow.pop %v843
        %v845 = vadd.f32 %v844, 1.0
        %v846 = vrcp.pop %v845
        %v847 = vmul.f32 1.0, %v846
        %v848 = vadd.f32 %v838, %v630
        %850 = vrot.lane.b32.xlu0 %v848, 64
        %v851 = vpop.permute.xlu0 %850
        %v853 = vmul.f32 %v847, %v851
        %855 = vrot.lane.b32.xlu0 %v853, 64
        %v856 = vpop.permute.xlu0 %855
        %v858 = vadd.f32 %v765, %v856
        %v859 = vtanh.pop %v858
        %v860 = vsub.f32 1.0, %v847
        %862 = vrot.lane.b32.xlu0 %v859, 96
        %v863 = vpop.permute.xlu0 %862
        %v865 = vmul.f32 %v860, %v863
        %v866 = vmul.f32 %v847, %v654
        %v867 = vadd.f32 %v865, %v866
        %v868 = vstv %s763
        %vm869 = vcmp.gt.s32.totalorder %v409, %v868
        %v870 = vsel %vm869, %v867, %v654
        %s871 = sadd.s32 %s430, 2
        %s872 = scalar_lea.vmem %s341, 16 [#allocation3]
        %v873 = vld [vmem:[%s872] sm:$0xff]
        %875 = vrot.lane.b32.xlu0 %v762, 96
        %v876 = vpop.permute.xlu0 %875
        %v877 = vsel %vm435, %v876, 0
        %879 = vmatprep.subr.mxu0 0.0
        %880 = vmatpush1.msra.mxu0 %v410
        %881 = vmatprep.subr.mxu0 0.0
        %882 = vmatpush1.msra.mxu0 %v411
        %883 = vmatprep.subr.mxu0 0.0
        %884 = vmatpush1.msra.mxu0 %v412
        %885 = vmatprep.subr.mxu0 0.0
        %886 = vmatpush1.msra.mxu0 %v413
        %887 = vmatprep.subr.mxu0 0.0
        %888 = vmatpush1.msra.mxu0 0.0
        %889 = vmatprep.subr.mxu0 0.0
        %890 = vmatpush1.msra.mxu0 0.0
        %891 = vmatprep.subr.mxu0 0.0
        %892 = vmatpush1.msra.mxu0 0.0
        %893 = vmatprep.subr.mxu0 0.0
        %894 = vmatpush1.msra.mxu0 0.0
        %895 = vmatprep.subr.mxu0 0.0
        %896 = vmatpush1.msra.mxu0 0.0
        %897 = vmatprep.subr.mxu0 0.0
        %898 = vmatpush1.msra.mxu0 0.0
        %899 = vmatprep.subr.mxu0 0.0
        %900 = vmatpush1.msra.mxu0 0.0
        %901 = vmatprep.subr.mxu0 0.0
        %902 = vmatpush1.msra.mxu0 0.0
        %903 = vmatprep.subr.mxu0 0.0
        %904 = vmatpush1.msra.mxu0 0.0
        %905 = vmatprep.subr.mxu0 0.0
        %906 = vmatpush1.msra.mxu0 0.0
        %907 = vmatprep.subr.mxu0 0.0
        %908 = vmatpush1.msra.mxu0 0.0
        %909 = vmatprep.subr.mxu0 0.0
        %910 = vmatpush1.msra.mxu0 0.0
        %911 = vmatprep.subr.mxu0 0.0
        %912 = vmatpush1.msra.mxu0 0.0
        %913 = vmatprep.subr.mxu0 0.0
        %914 = vmatpush1.msra.mxu0 0.0
        %915 = vmatprep.subr.mxu0 0.0
        %916 = vmatpush1.msra.mxu0 0.0
        %917 = vmatprep.subr.mxu0 0.0
        %918 = vmatpush1.msra.mxu0 0.0
        %919 = vmatprep.subr.mxu0 0.0
        %920 = vmatpush1.msra.mxu0 0.0
        %921 = vmatprep.subr.mxu0 0.0
        %922 = vmatpush1.msra.mxu0 0.0
        %923 = vmatprep.subr.mxu0 0.0
        %924 = vmatpush1.msra.mxu0 0.0
        %925 = vmatprep.subr.mxu0 0.0
        %926 = vmatpush1.msra.mxu0 0.0
        %927 = vmatprep.subr.mxu0 0.0
        %928 = vmatpush1.msra.mxu0 0.0
        %929 = vmatprep.subr.mxu0 0.0
        %930 = vmatpush1.msra.mxu0 0.0
        %931 = vmatprep.subr.mxu0 0.0
        %932 = vmatpush1.msra.mxu0 0.0
        %933 = vmatprep.subr.mxu0 0.0
        %934 = vmatpush1.msra.mxu0 0.0
        %935 = vmatprep.subr.mxu0 0.0
        %936 = vmatpush1.msra.mxu0 0.0
        %937 = vmatprep.subr.mxu0 0.0
        %938 = vmatpush1.msra.mxu0 0.0
        %939 = vmatprep.subr.mxu0 0.0
        %940 = vmatpush1.msra.mxu0 0.0
        %941 = vmatprep.subr.mxu0 0.0
        %942 = vmatpush1.msra.mxu0 0.0
        %943 = vmatprep.mubr.f32.mxu0 0.0
        %944 = vmatmul.mubr.f32.gmra.mrb[0].mxu0 %v877
        %v945 = vpop.f32.mrb[0].mxu0
        %v946 = vadd.f32 0.0, %v945
        %v947 = vpop.f32.mrb[0].mxu0
        %948 = vdwg.mxu0
        %v949 = vadd.f32 %v873, %v946
        %v950 = vxor.u32 %v949, 2147483648
        %v951 = vmul.f32 %v950, 1.442695
        %v952 = vpow.pop %v951
        %v953 = vadd.f32 %v952, 1.0
        %v954 = vrcp.pop %v953
        %v955 = vmul.f32 1.0, %v954
        %v956 = vadd.f32 %v946, %v517
        %958 = vrot.lane.b32.xlu0 %v956, 64
        %v959 = vpop.permute.xlu0 %958
        %v961 = vmul.f32 %v955, %v959
        %963 = vrot.lane.b32.xlu0 %v961, 64
        %v964 = vpop.permute.xlu0 %963
        %v966 = vadd.f32 %v873, %v964
        %v967 = vtanh.pop %v966
        %v968 = vsub.f32 1.0, %v955
        %970 = vrot.lane.b32.xlu0 %v967, 96
        %v971 = vpop.permute.xlu0 %970
        %v973 = vmul.f32 %v968, %v971
        %v974 = vmul.f32 %v955, %v762
        %v975 = vadd.f32 %v973, %v974
        %v976 = vstv %s871
        %vm977 = vcmp.gt.s32.totalorder %v409, %v976
        %v978 = vsel %vm977, %v975, %v762
        %s979 = sadd.s32 %s432, 1
        %s980 = scalar_lea.vmem %s350, 8 [#allocation6]
        %v981 = vld [vmem:[%s980] sm:$0xff]
        %983 = vrot.lane.b32.xlu0 %v870, 96
        %v984 = vpop.permute.xlu0 %983
        %v985 = vsel %vm435, %v984, 0
        %987 = vmatprep.subr.mxu0 0.0
        %988 = vmatpush1.msra.mxu0 %v414
        %989 = vmatprep.subr.mxu0 0.0
        %990 = vmatpush1.msra.mxu0 %v415
        %991 = vmatprep.subr.mxu0 0.0
        %992 = vmatpush1.msra.mxu0 %v416
        %993 = vmatprep.subr.mxu0 0.0
        %994 = vmatpush1.msra.mxu0 %v417
        %995 = vmatprep.subr.mxu0 0.0
        %996 = vmatpush1.msra.mxu0 0.0
        %997 = vmatprep.subr.mxu0 0.0
        %998 = vmatpush1.msra.mxu0 0.0
        %999 = vmatprep.subr.mxu0 0.0
        %1000 = vmatpush1.msra.mxu0 0.0
        %1001 = vmatprep.subr.mxu0 0.0
        %1002 = vmatpush1.msra.mxu0 0.0
        %1003 = vmatprep.subr.mxu0 0.0
        %1004 = vmatpush1.msra.mxu0 0.0
        %1005 = vmatprep.subr.mxu0 0.0
        %1006 = vmatpush1.msra.mxu0 0.0
        %1007 = vmatprep.subr.mxu0 0.0
        %1008 = vmatpush1.msra.mxu0 0.0
        %1009 = vmatprep.subr.mxu0 0.0
        %1010 = vmatpush1.msra.mxu0 0.0
        %1011 = vmatprep.subr.mxu0 0.0
        %1012 = vmatpush1.msra.mxu0 0.0
        %1013 = vmatprep.subr.mxu0 0.0
        %1014 = vmatpush1.msra.mxu0 0.0
        %1015 = vmatprep.subr.mxu0 0.0
        %1016 = vmatpush1.msra.mxu0 0.0
        %1017 = vmatprep.subr.mxu0 0.0
        %1018 = vmatpush1.msra.mxu0 0.0
        %1019 = vmatprep.subr.mxu0 0.0
        %1020 = vmatpush1.msra.mxu0 0.0
        %1021 = vmatprep.subr.mxu0 0.0
        %1022 = vmatpush1.msra.mxu0 0.0
        %1023 = vmatprep.subr.mxu0 0.0
        %1024 = vmatpush1.msra.mxu0 0.0
        %1025 = vmatprep.subr.mxu0 0.0
        %1026 = vmatpush1.msra.mxu0 0.0
        %1027 = vmatprep.subr.mxu0 0.0
        %1028 = vmatpush1.msra.mxu0 0.0
        %1029 = vmatprep.subr.mxu0 0.0
        %1030 = vmatpush1.msra.mxu0 0.0
        %1031 = vmatprep.subr.mxu0 0.0
        %1032 = vmatpush1.msra.mxu0 0.0
        %1033 = vmatprep.subr.mxu0 0.0
        %1034 = vmatpush1.msra.mxu0 0.0
        %1035 = vmatprep.subr.mxu0 0.0
        %1036 = vmatpush1.msra.mxu0 0.0
        %1037 = vmatprep.subr.mxu0 0.0
        %1038 = vmatpush1.msra.mxu0 0.0
        %1039 = vmatprep.subr.mxu0 0.0
        %1040 = vmatpush1.msra.mxu0 0.0
        %1041 = vmatprep.subr.mxu0 0.0
        %1042 = vmatpush1.msra.mxu0 0.0
        %1043 = vmatprep.subr.mxu0 0.0
        %1044 = vmatpush1.msra.mxu0 0.0
        %1045 = vmatprep.subr.mxu0 0.0
        %1046 = vmatpush1.msra.mxu0 0.0
        %1047 = vmatprep.subr.mxu0 0.0
        %1048 = vmatpush1.msra.mxu0 0.0
        %1049 = vmatprep.subr.mxu0 0.0
        %1050 = vmatpush1.msra.mxu0 0.0
        %1051 = vmatprep.mubr.f32.mxu0 0.0
        %1052 = vmatmul.mubr.f32.gmra.mrb[0].mxu0 %v985
        %v1053 = vpop.f32.mrb[0].mxu0
        %v1054 = vadd.f32 0.0, %v1053
        %v1055 = vpop.f32.mrb[0].mxu0
        %1056 = vdwg.mxu0
        %v1057 = vadd.f32 %v981, %v1054
        %v1058 = vxor.u32 %v1057, 2147483648
        %v1059 = vmul.f32 %v1058, 1.442695
        %v1060 = vpow.pop %v1059
        %v1061 = vadd.f32 %v1060, 1.0
        %v1062 = vrcp.pop %v1061
        %v1063 = vmul.f32 1.0, %v1062
        %v1064 = vadd.f32 %v1054, %v630
        %1066 = vrot.lane.b32.xlu0 %v1064, 64
        %v1067 = vpop.permute.xlu0 %1066
        %v1069 = vmul.f32 %v1063, %v1067
        %1071 = vrot.lane.b32.xlu0 %v1069, 64
        %v1072 = vpop.permute.xlu0 %1071
        %v1074 = vadd.f32 %v981, %v1072
        %v1075 = vtanh.pop %v1074
        %v1076 = vsub.f32 1.0, %v1063
        %1078 = vrot.lane.b32.xlu0 %v1075, 96
        %v1079 = vpop.permute.xlu0 %1078
        %v1081 = vmul.f32 %v1076, %v1079
        %v1082 = vmul.f32 %v1063, %v870
        %v1083 = vadd.f32 %v1081, %v1082
        %v1084 = vstv %s979
        %vm1085 = vcmp.gt.s32.totalorder %v409, %v1084
        %v1086 = vsel %vm1085, %v1083, %v870
        %s1087 = sadd.s32 %s430, 3
        %s1088 = scalar_lea.vmem %s341, 24 [#allocation3]
        %v1089 = vld [vmem:[%s1088] sm:$0xff]
        %1091 = vrot.lane.b32.xlu0 %v978, 96
        %v1092 = vpop.permute.xlu0 %1091
        %v1093 = vsel %vm435, %v1092, 0
        %1095 = vmatprep.subr.mxu0 0.0
        %1096 = vmatpush1.msra.mxu0 %v410
        %1097 = vmatprep.subr.mxu0 0.0
        %1098 = vmatpush1.msra.mxu0 %v411
        %1099 = vmatprep.subr.mxu0 0.0
        %1100 = vmatpush1.msra.mxu0 %v412
        %1101 = vmatprep.subr.mxu0 0.0
        %1102 = vmatpush1.msra.mxu0 %v413
        %1103 = vmatprep.subr.mxu0 0.0
        %1104 = vmatpush1.msra.mxu0 0.0
        %1105 = vmatprep.subr.mxu0 0.0
        %1106 = vmatpush1.msra.mxu0 0.0
        %1107 = vmatprep.subr.mxu0 0.0
        %1108 = vmatpush1.msra.mxu0 0.0
        %1109 = vmatprep.subr.mxu0 0.0
        %1110 = vmatpush1.msra.mxu0 0.0
        %1111 = vmatprep.subr.mxu0 0.0
        %1112 = vmatpush1.msra.mxu0 0.0
        %1113 = vmatprep.subr.mxu0 0.0
        %1114 = vmatpush1.msra.mxu0 0.0
        %1115 = vmatprep.subr.mxu0 0.0
        %1116 = vmatpush1.msra.mxu0 0.0
        %1117 = vmatprep.subr.mxu0 0.0
        %1118 = vmatpush1.msra.mxu0 0.0
        %1119 = vmatprep.subr.mxu0 0.0
        %1120 = vmatpush1.msra.mxu0 0.0
        %1121 = vmatprep.subr.mxu0 0.0
        %1122 = vmatpush1.msra.mxu0 0.0
        %1123 = vmatprep.subr.mxu0 0.0
        %1124 = vmatpush1.msra.mxu0 0.0
        %1125 = vmatprep.subr.mxu0 0.0
        %1126 = vmatpush1.msra.mxu0 0.0
        %1127 = vmatprep.subr.mxu0 0.0
        %1128 = vmatpush1.msra.mxu0 0.0
        %1129 = vmatprep.subr.mxu0 0.0
        %1130 = vmatpush1.msra.mxu0 0.0
        %1131 = vmatprep.subr.mxu0 0.0
        %1132 = vmatpush1.msra.mxu0 0.0
        %1133 = vmatprep.subr.mxu0 0.0
        %1134 = vmatpush1.msra.mxu0 0.0
        %1135 = vmatprep.subr.mxu0 0.0
        %1136 = vmatpush1.msra.mxu0 0.0
        %1137 = vmatprep.subr.mxu0 0.0
        %1138 = vmatpush1.msra.mxu0 0.0
        %1139 = vmatprep.subr.mxu0 0.0
        %1140 = vmatpush1.msra.mxu0 0.0
        %1141 = vmatprep.subr.mxu0 0.0
        %1142 = vmatpush1.msra.mxu0 0.0
        %1143 = vmatprep.subr.mxu0 0.0
        %1144 = vmatpush1.msra.mxu0 0.0
        %1145 = vmatprep.subr.mxu0 0.0
        %1146 = vmatpush1.msra.mxu0 0.0
        %1147 = vmatprep.subr.mxu0 0.0
        %1148 = vmatpush1.msra.mxu0 0.0
        %1149 = vmatprep.subr.mxu0 0.0
        %1150 = vmatpush1.msra.mxu0 0.0
        %1151 = vmatprep.subr.mxu0 0.0
        %1152 = vmatpush1.msra.mxu0 0.0
        %1153 = vmatprep.subr.mxu0 0.0
        %1154 = vmatpush1.msra.mxu0 0.0
        %1155 = vmatprep.subr.mxu0 0.0
        %1156 = vmatpush1.msra.mxu0 0.0
        %1157 = vmatprep.subr.mxu0 0.0
        %1158 = vmatpush1.msra.mxu0 0.0
        %1159 = vmatprep.mubr.f32.mxu0 0.0
        %1160 = vmatmul.mubr.f32.gmra.mrb[0].mxu0 %v1093
        %v1161 = vpop.f32.mrb[0].mxu0
        %v1162 = vadd.f32 0.0, %v1161
        %v1163 = vpop.f32.mrb[0].mxu0
        %1164 = vdwg.mxu0
        %v1165 = vadd.f32 %v1089, %v1162
        %v1166 = vxor.u32 %v1165, 2147483648
        %v1167 = vmul.f32 %v1166, 1.442695
        %v1168 = vpow.pop %v1167
        %v1169 = vadd.f32 %v1168, 1.0
        %v1170 = vrcp.pop %v1169
        %v1171 = vmul.f32 1.0, %v1170
        %v1172 = vadd.f32 %v1162, %v517
        %1174 = vrot.lane.b32.xlu0 %v1172, 64
        %v1175 = vpop.permute.xlu0 %1174
        %v1177 = vmul.f32 %v1171, %v1175
        %1179 = vrot.lane.b32.xlu0 %v1177, 64
        %v1180 = vpop.permute.xlu0 %1179
        %v1182 = vadd.f32 %v1089, %v1180
        %v1183 = vtanh.pop %v1182
        %v1184 = vsub.f32 1.0, %v1171
        %1186 = vrot.lane.b32.xlu0 %v1183, 96
        %v1187 = vpop.permute.xlu0 %1186
        %v1189 = vmul.f32 %v1184, %v1187
        %v1190 = vmul.f32 %v1171, %v978
        %v1191 = vadd.f32 %v1189, %v1190
        %v1192 = vstv %s1087
        %vm1193 = vcmp.gt.s32.totalorder %v409, %v1192
        %v1194 = vsel %vm1193, %v1191, %v978
        %v1195 = vld [vmem:[%s350] sm:$0xff]
        %1197 = vrot.lane.b32.xlu0 %v1086, 96
        %v1198 = vpop.permute.xlu0 %1197
        %v1199 = vsel %vm435, %v1198, 0
        %1201 = vmatprep.subr.mxu0 0.0
        %1202 = vmatpush1.msra.mxu0 %v414
        %1203 = vmatprep.subr.mxu0 0.0
        %1204 = vmatpush1.msra.mxu0 %v415
        %1205 = vmatprep.subr.mxu0 0.0
        %1206 = vmatpush1.msra.mxu0 %v416
        %1207 = vmatprep.subr.mxu0 0.0
        %1208 = vmatpush1.msra.mxu0 %v417
        %1209 = vmatprep.subr.mxu0 0.0
        %1210 = vmatpush1.msra.mxu0 0.0
        %1211 = vmatprep.subr.mxu0 0.0
        %1212 = vmatpush1.msra.mxu0 0.0
        %1213 = vmatprep.subr.mxu0 0.0
        %1214 = vmatpush1.msra.mxu0 0.0
        %1215 = vmatprep.subr.mxu0 0.0
        %1216 = vmatpush1.msra.mxu0 0.0
        %1217 = vmatprep.subr.mxu0 0.0
        %1218 = vmatpush1.msra.mxu0 0.0
        %1219 = vmatprep.subr.mxu0 0.0
        %1220 = vmatpush1.msra.mxu0 0.0
        %1221 = vmatprep.subr.mxu0 0.0
        %1222 = vmatpush1.msra.mxu0 0.0
        %1223 = vmatprep.subr.mxu0 0.0
        %1224 = vmatpush1.msra.mxu0 0.0
        %1225 = vmatprep.subr.mxu0 0.0
        %1226 = vmatpush1.msra.mxu0 0.0
        %1227 = vmatprep.subr.mxu0 0.0
        %1228 = vmatpush1.msra.mxu0 0.0
        %1229 = vmatprep.subr.mxu0 0.0
        %1230 = vmatpush1.msra.mxu0 0.0
        %1231 = vmatprep.subr.mxu0 0.0
        %1232 = vmatpush1.msra.mxu0 0.0
        %1233 = vmatprep.subr.mxu0 0.0
        %1234 = vmatpush1.msra.mxu0 0.0
        %1235 = vmatprep.subr.mxu0 0.0
        %1236 = vmatpush1.msra.mxu0 0.0
        %1237 = vmatprep.subr.mxu0 0.0
        %1238 = vmatpush1.msra.mxu0 0.0
        %1239 = vmatprep.subr.mxu0 0.0
        %1240 = vmatpush1.msra.mxu0 0.0
        %1241 = vmatprep.subr.mxu0 0.0
        %1242 = vmatpush1.msra.mxu0 0.0
        %1243 = vmatprep.subr.mxu0 0.0
        %1244 = vmatpush1.msra.mxu0 0.0
        %1245 = vmatprep.subr.mxu0 0.0
        %1246 = vmatpush1.msra.mxu0 0.0
        %1247 = vmatprep.subr.mxu0 0.0
        %1248 = vmatpush1.msra.mxu0 0.0
        %1249 = vmatprep.subr.mxu0 0.0
        %1250 = vmatpush1.msra.mxu0 0.0
        %1251 = vmatprep.subr.mxu0 0.0
        %1252 = vmatpush1.msra.mxu0 0.0
        %1253 = vmatprep.subr.mxu0 0.0
        %1254 = vmatpush1.msra.mxu0 0.0
        %1255 = vmatprep.subr.mxu0 0.0
        %1256 = vmatpush1.msra.mxu0 0.0
        %1257 = vmatprep.subr.mxu0 0.0
        %1258 = vmatpush1.msra.mxu0 0.0
        %1259 = vmatprep.subr.mxu0 0.0
        %1260 = vmatpush1.msra.mxu0 0.0
        %1261 = vmatprep.subr.mxu0 0.0
        %1262 = vmatpush1.msra.mxu0 0.0
        %1263 = vmatprep.subr.mxu0 0.0
        %1264 = vmatpush1.msra.mxu0 0.0
        %1265 = vmatprep.mubr.f32.mxu0 0.0
        %1266 = vmatmul.mubr.f32.gmra.mrb[0].mxu0 %v1199
        %v1267 = vpop.f32.mrb[0].mxu0
        %v1268 = vadd.f32 0.0, %v1267
        %v1269 = vpop.f32.mrb[0].mxu0
        %1270 = vdwg.mxu0
        %v1271 = vadd.f32 %v1195, %v1268
        %v1272 = vxor.u32 %v1271, 2147483648
        %v1273 = vmul.f32 %v1272, 1.442695
        %v1274 = vpow.pop %v1273
        %v1275 = vadd.f32 %v1274, 1.0
        %v1276 = vrcp.pop %v1275
        %v1277 = vmul.f32 1.0, %v1276
        %v1278 = vadd.f32 %v1268, %v630
        %1280 = vrot.lane.b32.xlu0 %v1278, 64
        %v1281 = vpop.permute.xlu0 %1280
        %v1283 = vmul.f32 %v1277, %v1281
        %1285 = vrot.lane.b32.xlu0 %v1283, 64
        %v1286 = vpop.permute.xlu0 %1285
        %v1288 = vadd.f32 %v1195, %v1286
        %v1289 = vtanh.pop %v1288
        %v1290 = vsub.f32 1.0, %v1277
        %1292 = vrot.lane.b32.xlu0 %v1289, 96
        %v1293 = vpop.permute.xlu0 %1292
        %v1295 = vmul.f32 %v1290, %v1293
        %v1296 = vmul.f32 %v1277, %v1086
        %v1297 = vadd.f32 %v1295, %v1296
        %v1298 = vstv %s432
        %vm1299 = vcmp.gt.s32.totalorder %v409, %v1298
        %v1300 = vsel %vm1299, %v1297, %v1086
        %1302 = vrot.lane.b32.xlu0 %v1194, 96
        %v1303 = vpop.permute.xlu0 %1302
        %1305 = vst.msk [vmem:[#allocation2] sm:$0xff] %vm435, %v1303
        %vm1306 = vcmask 523520
        %1307 = vst.msk [vmem:[#allocation2] sm:$0xff] %vm1306, %v1300
        %p1308 = scmp.eq.s32.totalorder %s31, 1
        // Predicated region
        $region69: #{tpu_custom_call.1} parent=47 // pred_check
          %p1309 = pneg %p1308
        $region70: #{tpu_custom_call.1} parent=47 // pred_check_branch
          %1311 = sbr.rel (%p1309) target = $region72
        $region71: #{tpu_custom_call.1} parent=47 // pred_region
          %v1312 = vld [vmem:[#allocation2] sm:$0xff]
          %vm1313 = vcmask 523264
          %1314 = vst.msk [vmem:[#allocation11] sm:$0xff] %vm1313, %v1312
        $region72: #{tpu_custom_call.1} parent=47 // pred_fallthru
          _
        // Predicated region
        $region73: #{tpu_custom_call.1} parent=47 // pred_check
          %p1315 = pneg %p224
        $region74: #{tpu_custom_call.1} parent=47 // pred_check_branch
          %1317 = sbr.rel (%p1315) target = $region76
        $region75: #{tpu_custom_call.1} parent=47 // pred_region
          %s1319 = ssub.s32 128, 128
          %1320 = vsyncadd [#allocation5], %s1319
          %s1321 = smul.addr %s30, 128
          %s1322 = scalar_lea.hbm %s7, %s1321
          %s1324 = sshll.u32 [#allocation11], 4
          %s1325 = int_to_ptr.vmem [resolvable:$true] %s1324
          %1327 = dma.vmem_to_hbm [thread:$0]  %s1325, 128, %s1322, [#allocation5]
        $region76: #{tpu_custom_call.1} parent=47 // pred_fallthru
          _
        // Predicated region
        $region77: #{tpu_custom_call.1} parent=47 // pred_check
          %p1328 = pneg %p224
        $region78: #{tpu_custom_call.1} parent=47 // pred_check_branch
          %1330 = sbr.rel (%p1328) target = $region80
        $region79: #{tpu_custom_call.1} parent=47 // pred_region
          %1331 = dma.done [#allocation5], 128
        $region80: #{tpu_custom_call.1} parent=47 // pred_fallthru
          _
      $region48: #{tpu_custom_call.1} parent=5 // pred_fallthru
        _
      %p1332 = scmp.le.s32.totalorder 2, %s21
      // Predicated region
      $region81: #{tpu_custom_call.1} parent=5 // pred_check
        %p1333 = pneg %p1332
      $region82: #{tpu_custom_call.1} parent=5 // pred_check_branch
        %1335 = sbr.rel (%p1333) target = $region84
      $region83: #{tpu_custom_call.1} parent=5 // pred_region
        %s1336 = ssub.s32 %s21, 2
      $region84: #{tpu_custom_call.1} parent=5 // pred_fallthru
        _
    $region6: #{tpu_custom_call.1} parent=1 // loop_footer
      %s25 = sadd.s32 1, %s21
    $region7: #{tpu_custom_call.1} parent=1 // loop_footer_branch
      %20 = sbr.rel target = $region3
    $region8: #{tpu_custom_call.1} parent=1 // loop_exit
      _
    %1337 = vsyncpa [#allocation4], 1
    %s1338 = scalar_lea.sflag [#allocation4], 1
    %1339 = vsyncpa %s1338, 1
    %1340 = vsyncpa [#allocation7], 1
    %s1341 = scalar_lea.sflag [#allocation7], 1
    %1342 = vsyncpa %s1341, 1
    %1343 = vsyncpa [#allocation10], 1
    %1344 = vsyncpa [#allocation5], 1
    %s1345 = scalar_lea.sflag [#allocation5], 1
    %1346 = vsyncpa %s1345, 1

</llo_original>
